<compile_context>
chip_gen: v6e
topology: v6e:2x2x1
jax: 0.10.0
libtpu: 0.0.40
codegen_flags: <defaults>
</compile_context>

<pallas_src>
import jax
import jax.numpy as jnp
from jax import lax
from jax.experimental import pallas as pl
from jax.experimental.pallas import tpu as pltpu


def _make_kernel(H, W, C, Co, dilation, relu):
    d = dilation

    def kernel(x_ref, wdw_ref, b1_ref, a1_ref, wpw_ref, b2_ref, a2_ref, o_ref):
        # x_ref : (Hp, Wp, C)  padded, channels-last, one batch element
        # wdw_ref: (9, C)      depthwise 3x3 weights (BN1 scale folded in)
        # b1_ref/a1_ref: (1, C)   BN1 shift / PReLU1 alpha
        # wpw_ref: (C, Co)     pointwise weights (BN2 scale folded in)
        # b2_ref/a2_ref: (1, Co)  BN2 shift / PReLU2 alpha
        # o_ref : (H*W, Co)
        x = x_ref[...].astype(jnp.float32)
        wdw = wdw_ref[...].astype(jnp.float32)

        # Depthwise 3x3 (stride 1, dilation d): 9 shifted VPU multiply-adds.
        acc = None
        for ky in range(3):
            for kx in range(3):
                patch = x[ky * d:ky * d + H, kx * d:kx * d + W, :]   # (H, W, C)
                tap = wdw[ky * 3 + kx:ky * 3 + kx + 1, :]            # (1, C)
                term = patch * tap                                    # lane bcast
                acc = term if acc is None else acc + term

        y = acc + b1_ref[...]                          # BN1 shift (per channel)
        y = jnp.where(y >= 0, y, a1_ref[...] * y)      # PReLU1 (per channel)

        # Pointwise 1x1 conv on the MXU: (H*W, C) @ (C, Co), f32 accumulation.
        z = jnp.dot(y.reshape(H * W, C), wpw_ref[...].astype(jnp.float32),
                    preferred_element_type=jnp.float32)
        z = z + b2_ref[...]                            # BN2 shift
        if relu:
            z = jnp.where(z >= 0, z, a2_ref[...] * z)  # PReLU2
        o_ref[...] = z.astype(o_ref.dtype)

    return kernel


def dsconv3x3_forward(x, params, *, stride=1, dilation=1, relu=True, eps=1e-5):
    """DSConv3x3 forward pass (eval-mode BatchNorm).

    x: (N, C, H, W) float32, NCHW like PyTorch.
    params:
      dw_weight (C, 3, 3); bn1_gamma/bn1_beta/bn1_mean/bn1_var/prelu1_alpha (C,)
      pw_weight (Co, C);   bn2_gamma/bn2_beta/bn2_mean/bn2_var/prelu2_alpha (Co,)
    Returns (N, Co, H, W) float32.
    """
    if stride != 1:
        # TODO(synk): stride > 1 path not implemented (module default is stride=1).
        raise NotImplementedError("stride != 1 not supported")
    N, C, H, W = x.shape
    Co = params["pw_weight"].shape[0]
    d = dilation
    f32 = jnp.float32

    # Fold eval-mode BatchNorm into the bias-free convs: scale -> weights,
    # shift -> per-channel add inside the kernel.
    s1 = params["bn1_gamma"] / jnp.sqrt(params["bn1_var"] + eps)          # (C,)
    b1 = params["bn1_beta"] - params["bn1_mean"] * s1                     # (C,)
    s2 = params["bn2_gamma"] / jnp.sqrt(params["bn2_var"] + eps)          # (Co,)
    b2 = params["bn2_beta"] - params["bn2_mean"] * s2                     # (Co,)

    wdw = (params["dw_weight"].astype(f32) * s1[:, None, None])           # (C,3,3)
    wdw9 = jnp.transpose(wdw, (1, 2, 0)).reshape(9, C)                    # (9, C)
    wpw = params["pw_weight"].astype(f32) * s2[:, None]                   # (Co, C)
    wpw_t = jnp.transpose(wpw, (1, 0))                                    # (C, Co)

    b1 = b1.reshape(1, C).astype(f32)
    b2 = b2.reshape(1, Co).astype(f32)
    a1 = params["prelu1_alpha"].reshape(1, C).astype(f32)
    a2 = params["prelu2_alpha"].reshape(1, Co).astype(f32)

    # Channels-last, spatially padded input (pad = dilation, like the module).
    x_nhwc = jnp.transpose(x.astype(f32), (0, 2, 3, 1))                   # (N,H,W,C)
    x_pad = jnp.pad(x_nhwc, ((0, 0), (d, d), (d, d), (0, 0)))
    Hp, Wp = H + 2 * d, W + 2 * d

    kernel = _make_kernel(H, W, C, Co, d, relu)

    out = pl.pallas_call(
        kernel,
        out_shape=jax.ShapeDtypeStruct((N, H * W, Co), f32),
        grid_spec=pltpu.PrefetchScalarGridSpec(
            num_scalar_prefetch=0,
            grid=(N,),
            in_specs=[
                pl.BlockSpec((None, Hp, Wp, C), lambda n: (n, 0, 0, 0)),  # x (batch squeezed)
                pl.BlockSpec((9, C), lambda n: (0, 0)),                   # depthwise w
                pl.BlockSpec((1, C), lambda n: (0, 0)),                   # BN1 shift
                pl.BlockSpec((1, C), lambda n: (0, 0)),                   # PReLU1 alpha
                pl.BlockSpec((C, Co), lambda n: (0, 0)),                  # pointwise w
                pl.BlockSpec((1, Co), lambda n: (0, 0)),                  # BN2 shift
                pl.BlockSpec((1, Co), lambda n: (0, 0)),                  # PReLU2 alpha
            ],
            out_specs=pl.BlockSpec((None, H * W, Co), lambda n: (n, 0, 0)),
        ),
        compiler_params=pltpu.CompilerParams(
            dimension_semantics=("parallel",)),
    )(x_pad, wdw9, b1, a1, wpw_t, b2, a2)

    # (N, H*W, Co) -> (N, Co, H, W)  (NCHW, like PyTorch)
    return jnp.transpose(out.reshape(N, H, W, Co), (0, 3, 1, 2))


def _reference_forward(x, params, *, dilation=1, relu=True, eps=1e-5):
    """Plain-JAX reference matching PyTorch eval-mode DSConv3x3."""
    C = x.shape[1]
    d = dilation
    dw = lax.conv_general_dilated(
        x, params["dw_weight"].reshape(C, 1, 3, 3),
        window_strides=(1, 1), padding=((d, d), (d, d)), rhs_dilation=(d, d),
        dimension_numbers=("NCHW", "OIHW", "NCHW"), feature_group_count=C)

    def bn(v, g, b, m, var):
        r = lambda t: t.reshape(1, -1, 1, 1)
        return (v - r(m)) / jnp.sqrt(r(var) + eps) * r(g) + r(b)

    y = bn(dw, params["bn1_gamma"], params["bn1_beta"],
           params["bn1_mean"], params["bn1_var"])
    y = jnp.where(y >= 0, y, params["prelu1_alpha"].reshape(1, -1, 1, 1) * y)
    z = jnp.einsum("nchw,oc->nohw", y, params["pw_weight"])
    z = bn(z, params["bn2_gamma"], params["bn2_beta"],
           params["bn2_mean"], params["bn2_var"])
    if relu:
        z = jnp.where(z >= 0, z, params["prelu2_alpha"].reshape(1, -1, 1, 1) * z)
    return z


if __name__ == "__main__":
    key = jax.random.PRNGKey(0)
    keys = jax.random.split(key, 12)

    N, C, H, W = 2, 4, 16, 16     # in_channel = 4
    Co = 8                        # out_channel = 8
    x = jax.random.normal(keys[0], (N, C, H, W), dtype=jnp.float32)

    bd = 1.0 / (9 ** 0.5)         # depthwise fan_in = 1*3*3
    bp = 1.0 / (C ** 0.5)         # pointwise fan_in = C*1*1
    params = dict(
        dw_weight=jax.random.uniform(keys[1], (C, 3, 3), minval=-bd, maxval=bd),
        bn1_gamma=jax.random.uniform(keys[2], (C,), minval=0.5, maxval=1.5),
        bn1_beta=0.1 * jax.random.normal(keys[3], (C,)),
        bn1_mean=0.1 * jax.random.normal(keys[4], (C,)),
        bn1_var=jax.random.uniform(keys[5], (C,), minval=0.5, maxval=1.5),
        prelu1_alpha=jnp.full((C,), 0.25, jnp.float32),
        pw_weight=jax.random.uniform(keys[6], (Co, C), minval=-bp, maxval=bp),
        bn2_gamma=jax.random.uniform(keys[7], (Co,), minval=0.5, maxval=1.5),
        bn2_beta=0.1 * jax.random.normal(keys[8], (Co,)),
        bn2_mean=0.1 * jax.random.normal(keys[9], (Co,)),
        bn2_var=jax.random.uniform(keys[10], (Co,), minval=0.5, maxval=1.5),
        prelu2_alpha=jnp.full((Co,), 0.25, jnp.float32),
    )
    params = {k: v.astype(jnp.float32) for k, v in params.items()}

    out = dsconv3x3_forward(x, params, stride=1, dilation=1, relu=True)
    out = jax.block_until_ready(out)

    ref = _reference_forward(x, params, dilation=1, relu=True)
    assert out.shape == (N, Co, H, W), out.shape
    assert jnp.allclose(out, ref, atol=1e-4, rtol=1e-4), \
        float(jnp.max(jnp.abs(out - ref)))

    print("KERNEL_OK")
</pallas_src>

<mosaic_0001>
module attributes {stable_mosaic.version = 11 : i64} {
  func.func @kernel(%arg0: i32, %arg1: memref<1x18x18x4xf32, #tpu.memory_space<vmem>>, %arg2: memref<9x4xf32, #tpu.memory_space<vmem>>, %arg3: memref<1x4xf32, #tpu.memory_space<vmem>>, %arg4: memref<1x4xf32, #tpu.memory_space<vmem>>, %arg5: memref<4x8xf32, #tpu.memory_space<vmem>>, %arg6: memref<1x8xf32, #tpu.memory_space<vmem>>, %arg7: memref<1x8xf32, #tpu.memory_space<vmem>>, %arg8: memref<1x256x8xf32, #tpu.memory_space<vmem>>) attributes {dimension_semantics = [#tpu.dimension_semantics<parallel>], iteration_bounds = array<i64: 2>, scalar_prefetch = 0 : i64, scratch_operands = 0 : i64, tpu.core_type = #tpu.core_type<tc>, window_params = [{transform_indices = @transform_0, window_bounds = array<i64: 1, 18, 18, 4>}, {pipeline_mode = #tpu.pipeline_mode<synchronous>, transform_indices = @transform_1, window_bounds = array<i64: 9, 4>}, {pipeline_mode = #tpu.pipeline_mode<synchronous>, transform_indices = @transform_2, window_bounds = array<i64: 1, 4>}, {pipeline_mode = #tpu.pipeline_mode<synchronous>, transform_indices = @transform_3, window_bounds = array<i64: 1, 4>}, {pipeline_mode = #tpu.pipeline_mode<synchronous>, transform_indices = @transform_4, window_bounds = array<i64: 4, 8>}, {pipeline_mode = #tpu.pipeline_mode<synchronous>, transform_indices = @transform_5, window_bounds = array<i64: 1, 8>}, {pipeline_mode = #tpu.pipeline_mode<synchronous>, transform_indices = @transform_6, window_bounds = array<i64: 1, 8>}, {transform_indices = @transform_7, window_bounds = array<i64: 1, 256, 8>}]} {
    %c0 = arith.constant 0 : index
    %c0_0 = arith.constant 0 : index
    %c0_1 = arith.constant 0 : index
    %c0_2 = arith.constant 0 : index
    %0 = vector.load %arg1[%c0, %c0_0, %c0_1, %c0_2] : memref<1x18x18x4xf32, #tpu.memory_space<vmem>>, vector<1x18x18x4xf32>
    %1 = vector.shape_cast %0 : vector<1x18x18x4xf32> to vector<18x18x4xf32>
    %c0_3 = arith.constant 0 : index
    %c0_4 = arith.constant 0 : index
    %2 = vector.load %arg2[%c0_3, %c0_4] : memref<9x4xf32, #tpu.memory_space<vmem>>, vector<9x4xf32>
    %3 = vector.extract_strided_slice %1 {offsets = [0, 0, 0], sizes = [16, 16, 4], strides = [1, 1, 1]} : vector<18x18x4xf32> to vector<16x16x4xf32>
    %4 = vector.extract_strided_slice %2 {offsets = [0, 0], sizes = [1, 4], strides = [1, 1]} : vector<9x4xf32> to vector<1x4xf32>
    %5 = vector.shape_cast %4 : vector<1x4xf32> to vector<1x1x4xf32>
    %6 = vector.broadcast %5 : vector<1x1x4xf32> to vector<16x16x4xf32>
    %7 = arith.mulf %3, %6 : vector<16x16x4xf32>
    %8 = vector.extract_strided_slice %1 {offsets = [0, 1, 0], sizes = [16, 16, 4], strides = [1, 1, 1]} : vector<18x18x4xf32> to vector<16x16x4xf32>
    %9 = vector.extract_strided_slice %2 {offsets = [1, 0], sizes = [1, 4], strides = [1, 1]} : vector<9x4xf32> to vector<1x4xf32>
    %10 = vector.shape_cast %9 : vector<1x4xf32> to vector<1x1x4xf32>
    %11 = vector.broadcast %10 : vector<1x1x4xf32> to vector<16x16x4xf32>
    %12 = arith.mulf %8, %11 : vector<16x16x4xf32>
    %13 = arith.addf %7, %12 : vector<16x16x4xf32>
    %14 = vector.extract_strided_slice %1 {offsets = [0, 2, 0], sizes = [16, 16, 4], strides = [1, 1, 1]} : vector<18x18x4xf32> to vector<16x16x4xf32>
    %15 = vector.extract_strided_slice %2 {offsets = [2, 0], sizes = [1, 4], strides = [1, 1]} : vector<9x4xf32> to vector<1x4xf32>
    %16 = vector.shape_cast %15 : vector<1x4xf32> to vector<1x1x4xf32>
    %17 = vector.broadcast %16 : vector<1x1x4xf32> to vector<16x16x4xf32>
    %18 = arith.mulf %14, %17 : vector<16x16x4xf32>
    %19 = arith.addf %13, %18 : vector<16x16x4xf32>
    %20 = vector.extract_strided_slice %1 {offsets = [1, 0, 0], sizes = [16, 16, 4], strides = [1, 1, 1]} : vector<18x18x4xf32> to vector<16x16x4xf32>
    %21 = vector.extract_strided_slice %2 {offsets = [3, 0], sizes = [1, 4], strides = [1, 1]} : vector<9x4xf32> to vector<1x4xf32>
    %22 = vector.shape_cast %21 : vector<1x4xf32> to vector<1x1x4xf32>
    %23 = vector.broadcast %22 : vector<1x1x4xf32> to vector<16x16x4xf32>
    %24 = arith.mulf %20, %23 : vector<16x16x4xf32>
    %25 = arith.addf %19, %24 : vector<16x16x4xf32>
    %26 = vector.extract_strided_slice %1 {offsets = [1, 1, 0], sizes = [16, 16, 4], strides = [1, 1, 1]} : vector<18x18x4xf32> to vector<16x16x4xf32>
    %27 = vector.extract_strided_slice %2 {offsets = [4, 0], sizes = [1, 4], strides = [1, 1]} : vector<9x4xf32> to vector<1x4xf32>
    %28 = vector.shape_cast %27 : vector<1x4xf32> to vector<1x1x4xf32>
    %29 = vector.broadcast %28 : vector<1x1x4xf32> to vector<16x16x4xf32>
    %30 = arith.mulf %26, %29 : vector<16x16x4xf32>
    %31 = arith.addf %25, %30 : vector<16x16x4xf32>
    %32 = vector.extract_strided_slice %1 {offsets = [1, 2, 0], sizes = [16, 16, 4], strides = [1, 1, 1]} : vector<18x18x4xf32> to vector<16x16x4xf32>
    %33 = vector.extract_strided_slice %2 {offsets = [5, 0], sizes = [1, 4], strides = [1, 1]} : vector<9x4xf32> to vector<1x4xf32>
    %34 = vector.shape_cast %33 : vector<1x4xf32> to vector<1x1x4xf32>
    %35 = vector.broadcast %34 : vector<1x1x4xf32> to vector<16x16x4xf32>
    %36 = arith.mulf %32, %35 : vector<16x16x4xf32>
    %37 = arith.addf %31, %36 : vector<16x16x4xf32>
    %38 = vector.extract_strided_slice %1 {offsets = [2, 0, 0], sizes = [16, 16, 4], strides = [1, 1, 1]} : vector<18x18x4xf32> to vector<16x16x4xf32>
    %39 = vector.extract_strided_slice %2 {offsets = [6, 0], sizes = [1, 4], strides = [1, 1]} : vector<9x4xf32> to vector<1x4xf32>
    %40 = vector.shape_cast %39 : vector<1x4xf32> to vector<1x1x4xf32>
    %41 = vector.broadcast %40 : vector<1x1x4xf32> to vector<16x16x4xf32>
    %42 = arith.mulf %38, %41 : vector<16x16x4xf32>
    %43 = arith.addf %37, %42 : vector<16x16x4xf32>
    %44 = vector.extract_strided_slice %1 {offsets = [2, 1, 0], sizes = [16, 16, 4], strides = [1, 1, 1]} : vector<18x18x4xf32> to vector<16x16x4xf32>
    %45 = vector.extract_strided_slice %2 {offsets = [7, 0], sizes = [1, 4], strides = [1, 1]} : vector<9x4xf32> to vector<1x4xf32>
    %46 = vector.shape_cast %45 : vector<1x4xf32> to vector<1x1x4xf32>
    %47 = vector.broadcast %46 : vector<1x1x4xf32> to vector<16x16x4xf32>
    %48 = arith.mulf %44, %47 : vector<16x16x4xf32>
    %49 = arith.addf %43, %48 : vector<16x16x4xf32>
    %50 = vector.extract_strided_slice %1 {offsets = [2, 2, 0], sizes = [16, 16, 4], strides = [1, 1, 1]} : vector<18x18x4xf32> to vector<16x16x4xf32>
    %51 = vector.extract_strided_slice %2 {offsets = [8, 0], sizes = [1, 4], strides = [1, 1]} : vector<9x4xf32> to vector<1x4xf32>
    %52 = vector.shape_cast %51 : vector<1x4xf32> to vector<1x1x4xf32>
    %53 = vector.broadcast %52 : vector<1x1x4xf32> to vector<16x16x4xf32>
    %54 = arith.mulf %50, %53 : vector<16x16x4xf32>
    %55 = arith.addf %49, %54 : vector<16x16x4xf32>
    %c0_5 = arith.constant 0 : index
    %c0_6 = arith.constant 0 : index
    %56 = vector.load %arg3[%c0_5, %c0_6] : memref<1x4xf32, #tpu.memory_space<vmem>>, vector<1x4xf32>
    %57 = vector.shape_cast %56 : vector<1x4xf32> to vector<1x1x4xf32>
    %58 = vector.broadcast %57 : vector<1x1x4xf32> to vector<16x16x4xf32>
    %59 = arith.addf %55, %58 : vector<16x16x4xf32>
    %cst = arith.constant 0.000000e+00 : f32
    %60 = vector.broadcast %cst : f32 to vector<16x16x4xf32>
    %61 = arith.cmpf oge, %59, %60 : vector<16x16x4xf32>
    %c0_7 = arith.constant 0 : index
    %c0_8 = arith.constant 0 : index
    %62 = vector.load %arg4[%c0_7, %c0_8] : memref<1x4xf32, #tpu.memory_space<vmem>>, vector<1x4xf32>
    %63 = vector.shape_cast %62 : vector<1x4xf32> to vector<1x1x4xf32>
    %64 = vector.broadcast %63 : vector<1x1x4xf32> to vector<16x16x4xf32>
    %65 = arith.mulf %64, %59 : vector<16x16x4xf32>
    %66 = arith.select %61, %59, %65 : vector<16x16x4xi1>, vector<16x16x4xf32>
    %67 = vector.shape_cast %66 : vector<16x16x4xf32> to vector<256x4xf32>
    %c0_9 = arith.constant 0 : index
    %c0_10 = arith.constant 0 : index
    %68 = vector.load %arg5[%c0_9, %c0_10] : memref<4x8xf32, #tpu.memory_space<vmem>>, vector<4x8xf32>
    %cst_11 = arith.constant dense<0.000000e+00> : vector<256x8xf32>
    %69 = tpu.matmul %67, %68, %cst_11 {dimension_numbers = #tpu.dot_dimension_numbers<[1], [0], [0], [1], [0, 0, 1, 1], [], []>} : vector<256x4xf32>, vector<4x8xf32>, vector<256x8xf32> -> vector<256x8xf32>
    %c0_12 = arith.constant 0 : index
    %c0_13 = arith.constant 0 : index
    %70 = vector.load %arg6[%c0_12, %c0_13] : memref<1x8xf32, #tpu.memory_space<vmem>>, vector<1x8xf32>
    %71 = vector.broadcast %70 : vector<1x8xf32> to vector<256x8xf32>
    %72 = arith.addf %69, %71 : vector<256x8xf32>
    %cst_14 = arith.constant 0.000000e+00 : f32
    %73 = vector.broadcast %cst_14 : f32 to vector<256x8xf32>
    %74 = arith.cmpf oge, %72, %73 : vector<256x8xf32>
    %c0_15 = arith.constant 0 : index
    %c0_16 = arith.constant 0 : index
    %75 = vector.load %arg7[%c0_15, %c0_16] : memref<1x8xf32, #tpu.memory_space<vmem>>, vector<1x8xf32>
    %76 = vector.broadcast %75 : vector<1x8xf32> to vector<256x8xf32>
    %77 = arith.mulf %76, %72 : vector<256x8xf32>
    %78 = arith.select %74, %72, %77 : vector<256x8xi1>, vector<256x8xf32>
    %c0_17 = arith.constant 0 : index
    %c0_18 = arith.constant 0 : index
    %c0_19 = arith.constant 0 : index
    %79 = vector.load %arg8[%c0_17, %c0_18, %c0_19] : memref<1x256x8xf32, #tpu.memory_space<vmem>>, vector<1x256x8xf32>
    %80 = vector.shape_cast %79 : vector<1x256x8xf32> to vector<256x8xf32>
    %81 = vector.shape_cast %78 : vector<256x8xf32> to vector<1x256x8xf32>
    tpu.vector_store %arg8[%c0_17, %c0_18, %c0_19], %81 {strides = array<i32>} : memref<1x256x8xf32, #tpu.memory_space<vmem>>, vector<1x256x8xf32>,
    return
  }
  func.func @transform_0(%arg0: i32) -> (i32, i32, i32, i32) {
    %c0_i32 = arith.constant 0 : i32
    %c0_i32_0 = arith.constant 0 : i32
    %c0_i32_1 = arith.constant 0 : i32
    %c0_i32_2 = arith.constant 0 : i32
    return %arg0, %c0_i32, %c0_i32_0, %c0_i32_1 : i32, i32, i32, i32
  }
  func.func @transform_1(%arg0: i32) -> (i32, i32) {
    %c0_i32 = arith.constant 0 : i32
    %c0_i32_0 = arith.constant 0 : i32
    %c0_i32_1 = arith.constant 0 : i32
    return %c0_i32, %c0_i32_0 : i32, i32
  }
  func.func @transform_2(%arg0: i32) -> (i32, i32) {
    %c0_i32 = arith.constant 0 : i32
    %c0_i32_0 = arith.constant 0 : i32
    %c0_i32_1 = arith.constant 0 : i32
    return %c0_i32, %c0_i32_0 : i32, i32
  }
  func.func @transform_3(%arg0: i32) -> (i32, i32) {
    %c0_i32 = arith.constant 0 : i32
    %c0_i32_0 = arith.constant 0 : i32
    %c0_i32_1 = arith.constant 0 : i32
    return %c0_i32, %c0_i32_0 : i32, i32
  }
  func.func @transform_4(%arg0: i32) -> (i32, i32) {
    %c0_i32 = arith.constant 0 : i32
    %c0_i32_0 = arith.constant 0 : i32
    %c0_i32_1 = arith.constant 0 : i32
    return %c0_i32, %c0_i32_0 : i32, i32
  }
  func.func @transform_5(%arg0: i32) -> (i32, i32) {
    %c0_i32 = arith.constant 0 : i32
    %c0_i32_0 = arith.constant 0 : i32
    %c0_i32_1 = arith.constant 0 : i32
    return %c0_i32, %c0_i32_0 : i32, i32
  }
  func.func @transform_6(%arg0: i32) -> (i32, i32) {
    %c0_i32 = arith.constant 0 : i32
    %c0_i32_0 = arith.constant 0 : i32
    %c0_i32_1 = arith.constant 0 : i32
    return %c0_i32, %c0_i32_0 : i32, i32
  }
  func.func @transform_7(%arg0: i32) -> (i32, i32, i32) {
    %c0_i32 = arith.constant 0 : i32
    %c0_i32_0 = arith.constant 0 : i32
    %c0_i32_1 = arith.constant 0 : i32
    return %arg0, %c0_i32, %c0_i32_0 : i32, i32, i32
  }
}

</mosaic_0001>

<llo_original>
// kernel: tpu_custom_call.1
$region0: #{tpu_custom_call.1}
  #allocation0 [shape = 'u32[]', space=smem, size = 0x4, offset = 0x4, fixed_abs, tag = 'smem constant byte address 0x4 - core index']
  #allocation1 [shape = 'u32[144,128]{1,0:T(1,128)}', space=vmem, size = 0x12000, scoped, tag = 'internal scratch']
  %s0 = inlined_call_operand.vmem [shape: f32[2,18,18,4], index: 0, kind: input, shape index: {}]
  %s1 = inlined_call_operand.vmem [shape: f32[9,4], index: 1, kind: input, shape index: {}]
  %s2 = inlined_call_operand.vmem [shape: f32[1,4], index: 2, kind: input, shape index: {}]
  %s3 = inlined_call_operand.vmem [shape: f32[1,4], index: 3, kind: input, shape index: {}]
  %s4 = inlined_call_operand.vmem [shape: f32[4,8], index: 4, kind: input, shape index: {}]
  %s5 = inlined_call_operand.vmem [shape: f32[1,8], index: 5, kind: input, shape index: {}]
  %s6 = inlined_call_operand.vmem [shape: f32[1,8], index: 6, kind: input, shape index: {}]
  %s7 = inlined_call_operand.vmem [shape: f32[2,256,8], index: 7, kind: output, shape index: {}]
  %s8 = sld [smem:[#allocation0]]
  $region61: #{tpu_custom_call.1} parent=0
    _
  %s10 = ssub.s32 1, %s8
  %s11 = scalar_select 0, %s10, %s8
  loop: start=0, step=1, limit=4
  $region2: #{tpu_custom_call.1} parent=0 // loop_pre_header
    _
  $region3: #{tpu_custom_call.1} parent=0 // loop_header
    %s13 = sphi 0, %s17
    %p14 = scmp.ge.s32.totalorder %s13, 4
    %s23 = sphi 0, %s25
    %s26 = sphi 0, %s23
    %s27 = sphi 0, %s26
    %s43 = sphi 0, %s27
    %s47 = sphi 0, %s47
    %s49 = sphi 0, %s47
    %s50 = sphi 0, %s49
    %s64 = sphi 0, %s50
    %s68 = sphi 0, %s68
    %s70 = sphi 0, %s68
    %s71 = sphi 0, %s70
    %s85 = sphi 0, %s71
    %s89 = sphi 0, %s89
    %s91 = sphi 0, %s89
    %s92 = sphi 0, %s91
    %s106 = sphi 0, %s92
    %s110 = sphi 0, %s110
    %s112 = sphi 0, %s110
    %s113 = sphi 0, %s112
    %s127 = sphi 0, %s113
    %s131 = sphi 0, %s131
    %s133 = sphi 0, %s131
    %s134 = sphi 0, %s133
    %s148 = sphi 0, %s134
    %s152 = sphi 0, %s152
    %s154 = sphi 0, %s152
    %s155 = sphi 0, %s154
    %s169 = sphi 0, %s155
    %s175 = sphi 0, %s177
    %s178 = sphi 0, %s175
    %s179 = sphi 0, %s178
    %s195 = sphi 0, %s179
  $region4: #{tpu_custom_call.1} parent=0 // loop_header_branch
    %16 = sbr.rel (%p14) target = $region8
  $region5: #{tpu_custom_call.1} parent=0 // loop_body
    %s18 = ssub.s32 %s13, 1
    %s19 = ssub.s32 %s13, 2
    %s20 = sadd.s32 %s13, 1
    %s21 = ssub.s32 %s13, %s20
    %p22 = scmp.eq.s32.totalorder %s21, 0
    %s24 = sadd.s32 %s23, 1
    %s25 = scalar_select %p22, %s23, %s24
    %p28 = pneg %p22
    %p29 = scmp.eq.s32.totalorder %s13, 1
    %p30 = por %p28, %p29
    %p31 = scmp.ne.s32.totalorder %s23, %s26
    %p32 = scmp.eq.s32.totalorder %s13, 0
    %p33 = por %p31, %p32
    %p34 = scmp.ne.s32.totalorder %s23, %s26
    %p35 = scmp.eq.s32.totalorder %s18, 1
    %p36 = por %p34, %p35
    %p37 = scmp.ne.s32.totalorder %s26, %s27
    %p38 = scmp.eq.s32.totalorder %s18, 0
    %p39 = por %p37, %p38
    %p40 = scmp.ne.s32.totalorder %s26, %s27
    %p41 = scmp.eq.s32.totalorder %s19, 1
    %p42 = por %p40, %p41
    %p44 = scmp.ne.s32.totalorder %s27, %s43
    %p45 = scmp.eq.s32.totalorder %s19, 0
    %p46 = por %p44, %p45
    %s48 = sadd.s32 %s47, 1
    %p51 = scmp.eq.s32.totalorder %s13, 1
    %p52 = scmp.ne.s32.totalorder %s47, %s49
    %p53 = scmp.eq.s32.totalorder %s13, 0
    %p54 = por %p52, %p53
    %p55 = scmp.ne.s32.totalorder %s47, %s49
    %p56 = scmp.eq.s32.totalorder %s18, 1
    %p57 = por %p55, %p56
    %p58 = scmp.ne.s32.totalorder %s49, %s50
    %p59 = scmp.eq.s32.totalorder %s18, 0
    %p60 = por %p58, %p59
    %p61 = scmp.ne.s32.totalorder %s49, %s50
    %p62 = scmp.eq.s32.totalorder %s19, 1
    %p63 = por %p61, %p62
    %p65 = scmp.ne.s32.totalorder %s50, %s64
    %p66 = scmp.eq.s32.totalorder %s19, 0
    %p67 = por %p65, %p66
    %s69 = sadd.s32 %s68, 1
    %p72 = scmp.eq.s32.totalorder %s13, 1
    %p73 = scmp.ne.s32.totalorder %s68, %s70
    %p74 = scmp.eq.s32.totalorder %s13, 0
    %p75 = por %p73, %p74
    %p76 = scmp.ne.s32.totalorder %s68, %s70
    %p77 = scmp.eq.s32.totalorder %s18, 1
    %p78 = por %p76, %p77
    %p79 = scmp.ne.s32.totalorder %s70, %s71
    %p80 = scmp.eq.s32.totalorder %s18, 0
    %p81 = por %p79, %p80
    %p82 = scmp.ne.s32.totalorder %s70, %s71
    %p83 = scmp.eq.s32.totalorder %s19, 1
    %p84 = por %p82, %p83
    %p86 = scmp.ne.s32.totalorder %s71, %s85
    %p87 = scmp.eq.s32.totalorder %s19, 0
    %p88 = por %p86, %p87
    %s90 = sadd.s32 %s89, 1
    %p93 = scmp.eq.s32.totalorder %s13, 1
    %p94 = scmp.ne.s32.totalorder %s89, %s91
    %p95 = scmp.eq.s32.totalorder %s13, 0
    %p96 = por %p94, %p95
    %p97 = scmp.ne.s32.totalorder %s89, %s91
    %p98 = scmp.eq.s32.totalorder %s18, 1
    %p99 = por %p97, %p98
    %p100 = scmp.ne.s32.totalorder %s91, %s92
    %p101 = scmp.eq.s32.totalorder %s18, 0
    %p102 = por %p100, %p101
    %p103 = scmp.ne.s32.totalorder %s91, %s92
    %p104 = scmp.eq.s32.totalorder %s19, 1
    %p105 = por %p103, %p104
    %p107 = scmp.ne.s32.totalorder %s92, %s106
    %p108 = scmp.eq.s32.totalorder %s19, 0
    %p109 = por %p107, %p108
    %s111 = sadd.s32 %s110, 1
    %p114 = scmp.eq.s32.totalorder %s13, 1
    %p115 = scmp.ne.s32.totalorder %s110, %s112
    %p116 = scmp.eq.s32.totalorder %s13, 0
    %p117 = por %p115, %p116
    %p118 = scmp.ne.s32.totalorder %s110, %s112
    %p119 = scmp.eq.s32.totalorder %s18, 1
    %p120 = por %p118, %p119
    %p121 = scmp.ne.s32.totalorder %s112, %s113
    %p122 = scmp.eq.s32.totalorder %s18, 0
    %p123 = por %p121, %p122
    %p124 = scmp.ne.s32.totalorder %s112, %s113
    %p125 = scmp.eq.s32.totalorder %s19, 1
    %p126 = por %p124, %p125
    %p128 = scmp.ne.s32.totalorder %s113, %s127
    %p129 = scmp.eq.s32.totalorder %s19, 0
    %p130 = por %p128, %p129
    %s132 = sadd.s32 %s131, 1
    %p135 = scmp.eq.s32.totalorder %s13, 1
    %p136 = scmp.ne.s32.totalorder %s131, %s133
    %p137 = scmp.eq.s32.totalorder %s13, 0
    %p138 = por %p136, %p137
    %p139 = scmp.ne.s32.totalorder %s131, %s133
    %p140 = scmp.eq.s32.totalorder %s18, 1
    %p141 = por %p139, %p140
    %p142 = scmp.ne.s32.totalorder %s133, %s134
    %p143 = scmp.eq.s32.totalorder %s18, 0
    %p144 = por %p142, %p143
    %p145 = scmp.ne.s32.totalorder %s133, %s134
    %p146 = scmp.eq.s32.totalorder %s19, 1
    %p147 = por %p145, %p146
    %p149 = scmp.ne.s32.totalorder %s134, %s148
    %p150 = scmp.eq.s32.totalorder %s19, 0
    %p151 = por %p149, %p150
    %s153 = sadd.s32 %s152, 1
    %p156 = scmp.eq.s32.totalorder %s13, 1
    %p157 = scmp.ne.s32.totalorder %s152, %s154
    %p158 = scmp.eq.s32.totalorder %s13, 0
    %p159 = por %p157, %p158
    %p160 = scmp.ne.s32.totalorder %s152, %s154
    %p161 = scmp.eq.s32.totalorder %s18, 1
    %p162 = por %p160, %p161
    %p163 = scmp.ne.s32.totalorder %s154, %s155
    %p164 = scmp.eq.s32.totalorder %s18, 0
    %p165 = por %p163, %p164
    %p166 = scmp.ne.s32.totalorder %s154, %s155
    %p167 = scmp.eq.s32.totalorder %s19, 1
    %p168 = por %p166, %p167
    %p170 = scmp.ne.s32.totalorder %s155, %s169
    %p171 = scmp.eq.s32.totalorder %s19, 0
    %p172 = por %p170, %p171
    %s173 = ssub.s32 %s13, %s20
    %p174 = scmp.eq.s32.totalorder %s173, 0
    %s176 = sadd.s32 %s175, 1
    %s177 = scalar_select %p174, %s175, %s176
    %p180 = pneg %p174
    %p181 = scmp.eq.s32.totalorder %s13, 1
    %p182 = por %p180, %p181
    %p183 = scmp.ne.s32.totalorder %s175, %s178
    %p184 = scmp.eq.s32.totalorder %s13, 0
    %p185 = por %p183, %p184
    %p186 = scmp.ne.s32.totalorder %s175, %s178
    %p187 = scmp.eq.s32.totalorder %s18, 1
    %p188 = por %p186, %p187
    %p189 = scmp.ne.s32.totalorder %s178, %s179
    %p190 = scmp.eq.s32.totalorder %s18, 0
    %p191 = por %p189, %p190
    %p192 = scmp.ne.s32.totalorder %s178, %s179
    %p193 = scmp.eq.s32.totalorder %s19, 1
    %p194 = por %p192, %p193
    %p196 = scmp.ne.s32.totalorder %s179, %s195
    %p197 = scmp.eq.s32.totalorder %s19, 0
    %p198 = por %p196, %p197
    %p199 = scmp.le.s32.totalorder 1, %s13
    %p200 = scmp.lt.s32.totalorder %s13, 3
    %p201 = pnand %p199, %p200
    %p202 = pneg %p201
    // Predicated region
    $region9: #{tpu_custom_call.1} parent=5 // pred_check
      _
    $region10: #{tpu_custom_call.1} parent=5 // pred_check_branch
      %204 = sbr.rel (%p201) target = $region12
    $region11: #{tpu_custom_call.1} parent=5 // pred_region
      %s205 = ssub.s32 %s13, 1
      // Predicated region
      $region13: #{tpu_custom_call.1} parent=11 // pred_check
        %p206 = pneg %p60
      $region14: #{tpu_custom_call.1} parent=11 // pred_check_branch
        %208 = sbr.rel (%p206) target = $region16
      $region15: #{tpu_custom_call.1} parent=11 // pred_region
        _
      $region16: #{tpu_custom_call.1} parent=11 // pred_fallthru
        _
      // Predicated region
      $region17: #{tpu_custom_call.1} parent=11 // pred_check
        %p209 = pneg %p81
      $region18: #{tpu_custom_call.1} parent=11 // pred_check_branch
        %211 = sbr.rel (%p209) target = $region20
      $region19: #{tpu_custom_call.1} parent=11 // pred_region
        _
      $region20: #{tpu_custom_call.1} parent=11 // pred_fallthru
        _
      // Predicated region
      $region21: #{tpu_custom_call.1} parent=11 // pred_check
        %p212 = pneg %p102
      $region22: #{tpu_custom_call.1} parent=11 // pred_check_branch
        %214 = sbr.rel (%p212) target = $region24
      $region23: #{tpu_custom_call.1} parent=11 // pred_region
        _
      $region24: #{tpu_custom_call.1} parent=11 // pred_fallthru
        _
      // Predicated region
      $region25: #{tpu_custom_call.1} parent=11 // pred_check
        %p215 = pneg %p123
      $region26: #{tpu_custom_call.1} parent=11 // pred_check_branch
        %217 = sbr.rel (%p215) target = $region28
      $region27: #{tpu_custom_call.1} parent=11 // pred_region
        _
      $region28: #{tpu_custom_call.1} parent=11 // pred_fallthru
        _
      // Predicated region
      $region29: #{tpu_custom_call.1} parent=11 // pred_check
        %p218 = pneg %p144
      $region30: #{tpu_custom_call.1} parent=11 // pred_check_branch
        %220 = sbr.rel (%p218) target = $region32
      $region31: #{tpu_custom_call.1} parent=11 // pred_region
        _
      $region32: #{tpu_custom_call.1} parent=11 // pred_fallthru
        _
      // Predicated region
      $region33: #{tpu_custom_call.1} parent=11 // pred_check
        %p221 = pneg %p165
      $region34: #{tpu_custom_call.1} parent=11 // pred_check_branch
        %223 = sbr.rel (%p221) target = $region36
      $region35: #{tpu_custom_call.1} parent=11 // pred_region
        _
      $region36: #{tpu_custom_call.1} parent=11 // pred_fallthru
        _
    $region12: #{tpu_custom_call.1} parent=5 // pred_fallthru
      _
    %p224 = scmp.lt.s32.totalorder %s13, 2
    // Predicated region
    $region37: #{tpu_custom_call.1} parent=5 // pred_check
      %p225 = pneg %p224
    $region38: #{tpu_custom_call.1} parent=5 // pred_check_branch
      %227 = sbr.rel (%p225) target = $region40
    $region39: #{tpu_custom_call.1} parent=5 // pred_region
      // Predicated region
      $region41: #{tpu_custom_call.1} parent=39 // pred_check
        %p228 = pneg %p33
      $region42: #{tpu_custom_call.1} parent=39 // pred_check_branch
        %230 = sbr.rel (%p228) target = $region44
      $region43: #{tpu_custom_call.1} parent=39 // pred_region
        %p231 = scmp.lt.s32.totalorder %s13, 1
        %s232 = scalar_select %p231, %s13, 1
        %s233 = smul.addr %s232, 54
        %s234 = smul.addr %s233, 8
        %s235 = scalar_lea.vmem %s0, %s234
      $region44: #{tpu_custom_call.1} parent=39 // pred_fallthru
        _
    $region40: #{tpu_custom_call.1} parent=5 // pred_fallthru
      _
    %p236 = scmp.le.s32.totalorder 1, %s13
    %p237 = scmp.lt.s32.totalorder %s13, 3
    %p238 = pnand %p236, %p237
    %p239 = pneg %p238
    // Predicated region
    $region45: #{tpu_custom_call.1} parent=5 // pred_check
      _
    $region46: #{tpu_custom_call.1} parent=5 // pred_check_branch
      %241 = sbr.rel (%p238) target = $region48
    $region47: #{tpu_custom_call.1} parent=5 // pred_region
      %s242 = ssub.s32 %s13, 1
      %p243 = scmp.lt.s32.totalorder %s18, 1
      %s244 = scalar_select %p243, %s18, 1
      %s245 = smul.addr %s244, 54
      %s246 = smul.addr %s245, 8
      %s247 = scalar_lea.vmem %s0, %s246
      %p248 = pneg %p39
      %p249 = pneg %p36
      %p250 = pneg %p60
      %p251 = pneg %p57
      %p252 = pneg %p81
      %p253 = pneg %p78
      %p254 = pneg %p102
      %p255 = pneg %p99
      %p256 = pneg %p123
      %p257 = pneg %p120
      %p258 = pneg %p144
      %p259 = pneg %p141
      %p260 = pneg %p165
      %p261 = pneg %p162
      %p262 = pneg %p191
      %p263 = pneg %p188
      %p264 = scmp.lt.s32.totalorder %s18, 1
      %s265 = scalar_select %p264, %s18, 1
      %s266 = smul.addr %s265, 32
      %s267 = smul.addr %s266, 8
      %s268 = scalar_lea.vmem %s7, %s267
      %p269 = scmp.lt.s32.totalorder %s18, 1
      %s270 = scalar_select %p269, %s18, 1
      %s271 = smul.addr %s270, 54
      %s272 = smul.addr %s271, 8
      %s273 = scalar_lea.vmem %s0, %s272
      %p274 = scmp.lt.s32.totalorder %s18, 1
      %s275 = scalar_select %p274, %s18, 1
      %s276 = smul.addr %s275, 32
      %s277 = smul.addr %s276, 8
      %s278 = scalar_lea.vmem %s7, %s277
      %v279 = vld [vmem:[%s273] sm:$0xff]
      %v280 = vld [vmem:[%s273 + $0x8] sm:$0xff]
      %v281 = vld [vmem:[%s273 + $0x10] sm:$0x3]
      %v282 = vld [vmem:[%s273 + $0x18] sm:$0xff]
      %v283 = vld [vmem:[%s273 + $0x20] sm:$0xff]
      %v284 = vld [vmem:[%s273 + $0x28] sm:$0x3]
      %v285 = vld [vmem:[%s273 + $0x30] sm:$0xff]
      %v286 = vld [vmem:[%s273 + $0x38] sm:$0xff]
      %v287 = vld [vmem:[%s273 + $0x40] sm:$0x3]
      %v288 = vld [vmem:[%s273 + $0x48] sm:$0xff]
      %v289 = vld [vmem:[%s273 + $0x50] sm:$0xff]
      %v290 = vld [vmem:[%s273 + $0x58] sm:$0x3]
      %v291 = vld [vmem:[%s273 + $0x60] sm:$0xff]
      %v292 = vld [vmem:[%s273 + $0x68] sm:$0xff]
      %v293 = vld [vmem:[%s273 + $0x70] sm:$0x3]
      %v294 = vld [vmem:[%s273 + $0x78] sm:$0xff]
      %v295 = vld [vmem:[%s273 + $0x80] sm:$0xff]
      %v296 = vld [vmem:[%s273 + $0x88] sm:$0x3]
      %v297 = vld [vmem:[%s273 + $0x90] sm:$0xff]
      %v298 = vld [vmem:[%s273 + $0x98] sm:$0xff]
      %v299 = vld [vmem:[%s273 + $0xa0] sm:$0x3]
      %v300 = vld [vmem:[%s273 + $0xa8] sm:$0xff]
      %v301 = vld [vmem:[%s273 + $0xb0] sm:$0xff]
      %v302 = vld [vmem:[%s273 + $0xb8] sm:$0x3]
      %v303 = vld [vmem:[%s273 + $0xc0] sm:$0xff]
      %v304 = vld [vmem:[%s273 + $0xc8] sm:$0xff]
      %v305 = vld [vmem:[%s273 + $0xd0] sm:$0x3]
      %v306 = vld [vmem:[%s273 + $0xd8] sm:$0xff]
      %v307 = vld [vmem:[%s273 + $0xe0] sm:$0xff]
      %v308 = vld [vmem:[%s273 + $0xe8] sm:$0x3]
      %v309 = vld [vmem:[%s273 + $0xf0] sm:$0xff]
      %v310 = vld [vmem:[%s273 + $0xf8] sm:$0xff]
      %v311 = vld [vmem:[%s273 + $0x100] sm:$0x3]
      %v312 = vld [vmem:[%s273 + $0x108] sm:$0xff]
      %v313 = vld [vmem:[%s273 + $0x110] sm:$0xff]
      %v314 = vld [vmem:[%s273 + $0x118] sm:$0x3]
      %v315 = vld [vmem:[%s273 + $0x120] sm:$0xff]
      %v316 = vld [vmem:[%s273 + $0x128] sm:$0xff]
      %v317 = vld [vmem:[%s273 + $0x130] sm:$0x3]
      %v318 = vld [vmem:[%s273 + $0x138] sm:$0xff]
      %v319 = vld [vmem:[%s273 + $0x140] sm:$0xff]
      %v320 = vld [vmem:[%s273 + $0x148] sm:$0x3]
      %v321 = vld [vmem:[%s273 + $0x150] sm:$0xff]
      %v322 = vld [vmem:[%s273 + $0x158] sm:$0xff]
      %v323 = vld [vmem:[%s273 + $0x160] sm:$0x3]
      %v324 = vld [vmem:[%s273 + $0x168] sm:$0xff]
      %v325 = vld [vmem:[%s273 + $0x170] sm:$0xff]
      %v326 = vld [vmem:[%s273 + $0x178] sm:$0x3]
      %v327 = vld [vmem:[%s273 + $0x180] sm:$0xff]
      %v328 = vld [vmem:[%s273 + $0x188] sm:$0xff]
      %v329 = vld [vmem:[%s273 + $0x190] sm:$0x3]
      %v330 = vld [vmem:[%s273 + $0x198] sm:$0xff]
      %v331 = vld [vmem:[%s273 + $0x1a0] sm:$0xff]
      %v332 = vld [vmem:[%s273 + $0x1a8] sm:$0x3]
      %v333 = vld [vmem:[%s1] sm:$0xff]
      %v334 = vld [vmem:[%s1 + $0x8] sm:$0x1]
      %v335 = vlaneseq
      %v336 = vshrl.u32 %v335, 7
      %v337 = vsub.s32 0, %v336
      %v338 = vrot.slane %v333, %v337
      %v339 = vmul.f32 %v279, %v338
      %v340 = vmul.f32 %v280, %v338
      %v341 = vmul.f32 %v282, %v338
      %v342 = vmul.f32 %v283, %v338
      %v343 = vmul.f32 %v285, %v338
      %v344 = vmul.f32 %v286, %v338
      %v345 = vmul.f32 %v288, %v338
      %v346 = vmul.f32 %v289, %v338
      %v347 = vmul.f32 %v291, %v338
      %v348 = vmul.f32 %v292, %v338
      %v349 = vmul.f32 %v294, %v338
      %v350 = vmul.f32 %v295, %v338
      %v351 = vmul.f32 %v297, %v338
      %v352 = vmul.f32 %v298, %v338
      %v353 = vmul.f32 %v300, %v338
      %v354 = vmul.f32 %v301, %v338
      %v355 = vmul.f32 %v303, %v338
      %v356 = vmul.f32 %v304, %v338
      %v357 = vmul.f32 %v306, %v338
      %v358 = vmul.f32 %v307, %v338
      %v359 = vmul.f32 %v309, %v338
      %v360 = vmul.f32 %v310, %v338
      %v361 = vmul.f32 %v312, %v338
      %v362 = vmul.f32 %v313, %v338
      %v363 = vmul.f32 %v315, %v338
      %v364 = vmul.f32 %v316, %v338
      %v365 = vmul.f32 %v318, %v338
      %v366 = vmul.f32 %v319, %v338
      %v367 = vmul.f32 %v321, %v338
      %v368 = vmul.f32 %v322, %v338
      %v369 = vmul.f32 %v324, %v338
      %v370 = vmul.f32 %v325, %v338
      %v371 = vlaneseq
      %v372 = vshrl.u32 %v371, 7
      %v373 = vsub.s32 1, %v372
      %v374 = vrot.slane %v333, %v373
      %v375 = vmul.f32 %v279, %v374
      %v376 = vmul.f32 %v280, %v374
      %v377 = vmul.f32 %v281, %v374
      %v378 = vmul.f32 %v282, %v374
      %v379 = vmul.f32 %v283, %v374
      %v380 = vmul.f32 %v284, %v374
      %v381 = vmul.f32 %v285, %v374
      %v382 = vmul.f32 %v286, %v374
      %v383 = vmul.f32 %v287, %v374
      %v384 = vmul.f32 %v288, %v374
      %v385 = vmul.f32 %v289, %v374
      %v386 = vmul.f32 %v290, %v374
      %v387 = vmul.f32 %v291, %v374
      %v388 = vmul.f32 %v292, %v374
      %v389 = vmul.f32 %v293, %v374
      %v390 = vmul.f32 %v294, %v374
      %v391 = vmul.f32 %v295, %v374
      %v392 = vmul.f32 %v296, %v374
      %v393 = vmul.f32 %v297, %v374
      %v394 = vmul.f32 %v298, %v374
      %v395 = vmul.f32 %v299, %v374
      %v396 = vmul.f32 %v300, %v374
      %v397 = vmul.f32 %v301, %v374
      %v398 = vmul.f32 %v302, %v374
      %v399 = vmul.f32 %v303, %v374
      %v400 = vmul.f32 %v304, %v374
      %v401 = vmul.f32 %v305, %v374
      %v402 = vmul.f32 %v306, %v374
      %v403 = vmul.f32 %v307, %v374
      %v404 = vmul.f32 %v308, %v374
      %v405 = vmul.f32 %v309, %v374
      %v406 = vmul.f32 %v310, %v374
      %v407 = vmul.f32 %v311, %v374
      %v408 = vmul.f32 %v312, %v374
      %v409 = vmul.f32 %v313, %v374
      %v410 = vmul.f32 %v314, %v374
      %v411 = vmul.f32 %v315, %v374
      %v412 = vmul.f32 %v316, %v374
      %v413 = vmul.f32 %v317, %v374
      %v414 = vmul.f32 %v318, %v374
      %v415 = vmul.f32 %v319, %v374
      %v416 = vmul.f32 %v320, %v374
      %v417 = vmul.f32 %v321, %v374
      %v418 = vmul.f32 %v322, %v374
      %v419 = vmul.f32 %v323, %v374
      %v420 = vmul.f32 %v324, %v374
      %v421 = vmul.f32 %v325, %v374
      %v422 = vmul.f32 %v326, %v374
      %vm471 = vcmask 1046528
      %v472 = vrot.slane %v375, 1
      %v473 = vrot.slane %v376, 1
      %v474 = vsel %vm471, %v472, %v473
      %v475 = vrot.slane %v377, 1
      %v476 = vsel %vm471, %v473, %v475
      %v477 = vrot.slane %v378, 1
      %v478 = vrot.slane %v379, 1
      %v479 = vsel %vm471, %v477, %v478
      %v480 = vrot.slane %v380, 1
      %v481 = vsel %vm471, %v478, %v480
      %v482 = vrot.slane %v381, 1
      %v483 = vrot.slane %v382, 1
      %v484 = vsel %vm471, %v482, %v483
      %v485 = vrot.slane %v383, 1
      %v486 = vsel %vm471, %v483, %v485
      %v487 = vrot.slane %v384, 1
      %v488 = vrot.slane %v385, 1
      %v489 = vsel %vm471, %v487, %v488
      %v490 = vrot.slane %v386, 1
      %v491 = vsel %vm471, %v488, %v490
      %v492 = vrot.slane %v387, 1
      %v493 = vrot.slane %v388, 1
      %v494 = vsel %vm471, %v492, %v493
      %v495 = vrot.slane %v389, 1
      %v496 = vsel %vm471, %v493, %v495
      %v497 = vrot.slane %v390, 1
      %v498 = vrot.slane %v391, 1
      %v499 = vsel %vm471, %v497, %v498
      %v500 = vrot.slane %v392, 1
      %v501 = vsel %vm471, %v498, %v500
      %v502 = vrot.slane %v393, 1
      %v503 = vrot.slane %v394, 1
      %v504 = vsel %vm471, %v502, %v503
      %v505 = vrot.slane %v395, 1
      %v506 = vsel %vm471, %v503, %v505
      %v507 = vrot.slane %v396, 1
      %v508 = vrot.slane %v397, 1
      %v509 = vsel %vm471, %v507, %v508
      %v510 = vrot.slane %v398, 1
      %v511 = vsel %vm471, %v508, %v510
      %v512 = vrot.slane %v399, 1
      %v513 = vrot.slane %v400, 1
      %v514 = vsel %vm471, %v512, %v513
      %v515 = vrot.slane %v401, 1
      %v516 = vsel %vm471, %v513, %v515
      %v517 = vrot.slane %v402, 1
      %v518 = vrot.slane %v403, 1
      %v519 = vsel %vm471, %v517, %v518
      %v520 = vrot.slane %v404, 1
      %v521 = vsel %vm471, %v518, %v520
      %v522 = vrot.slane %v405, 1
      %v523 = vrot.slane %v406, 1
      %v524 = vsel %vm471, %v522, %v523
      %v525 = vrot.slane %v407, 1
      %v526 = vsel %vm471, %v523, %v525
      %v527 = vrot.slane %v408, 1
      %v528 = vrot.slane %v409, 1
      %v529 = vsel %vm471, %v527, %v528
      %v530 = vrot.slane %v410, 1
      %v531 = vsel %vm471, %v528, %v530
      %v532 = vrot.slane %v411, 1
      %v533 = vrot.slane %v412, 1
      %v534 = vsel %vm471, %v532, %v533
      %v535 = vrot.slane %v413, 1
      %v536 = vsel %vm471, %v533, %v535
      %v537 = vrot.slane %v414, 1
      %v538 = vrot.slane %v415, 1
      %v539 = vsel %vm471, %v537, %v538
      %v540 = vrot.slane %v416, 1
      %v541 = vsel %vm471, %v538, %v540
      %v542 = vrot.slane %v417, 1
      %v543 = vrot.slane %v418, 1
      %v544 = vsel %vm471, %v542, %v543
      %v545 = vrot.slane %v419, 1
      %v546 = vsel %vm471, %v543, %v545
      %v547 = vrot.slane %v420, 1
      %v548 = vrot.slane %v421, 1
      %v549 = vsel %vm471, %v547, %v548
      %v550 = vrot.slane %v422, 1
      %v551 = vsel %vm471, %v548, %v550
      %v584 = vadd.f32 %v339, %v474
      %v585 = vadd.f32 %v340, %v476
      %v586 = vadd.f32 %v341, %v479
      %v587 = vadd.f32 %v342, %v481
      %v588 = vadd.f32 %v343, %v484
      %v589 = vadd.f32 %v344, %v486
      %v590 = vadd.f32 %v345, %v489
      %v591 = vadd.f32 %v346, %v491
      %v592 = vadd.f32 %v347, %v494
      %v593 = vadd.f32 %v348, %v496
      %v594 = vadd.f32 %v349, %v499
      %v595 = vadd.f32 %v350, %v501
      %v596 = vadd.f32 %v351, %v504
      %v597 = vadd.f32 %v352, %v506
      %v598 = vadd.f32 %v353, %v509
      %v599 = vadd.f32 %v354, %v511
      %v600 = vadd.f32 %v355, %v514
      %v601 = vadd.f32 %v356, %v516
      %v602 = vadd.f32 %v357, %v519
      %v603 = vadd.f32 %v358, %v521
      %v604 = vadd.f32 %v359, %v524
      %v605 = vadd.f32 %v360, %v526
      %v606 = vadd.f32 %v361, %v529
      %v607 = vadd.f32 %v362, %v531
      %v608 = vadd.f32 %v363, %v534
      %v609 = vadd.f32 %v364, %v536
      %v610 = vadd.f32 %v365, %v539
      %v611 = vadd.f32 %v366, %v541
      %v612 = vadd.f32 %v367, %v544
      %v613 = vadd.f32 %v368, %v546
      %v614 = vadd.f32 %v369, %v549
      %v615 = vadd.f32 %v370, %v551
      %v616 = vlaneseq
      %v617 = vshrl.u32 %v616, 7
      %v618 = vsub.s32 2, %v617
      %v619 = vrot.slane %v333, %v618
      %v620 = vmul.f32 %v279, %v619
      %v621 = vmul.f32 %v280, %v619
      %v622 = vmul.f32 %v281, %v619
      %v623 = vmul.f32 %v282, %v619
      %v624 = vmul.f32 %v283, %v619
      %v625 = vmul.f32 %v284, %v619
      %v626 = vmul.f32 %v285, %v619
      %v627 = vmul.f32 %v286, %v619
      %v628 = vmul.f32 %v287, %v619
      %v629 = vmul.f32 %v288, %v619
      %v630 = vmul.f32 %v289, %v619
      %v631 = vmul.f32 %v290, %v619
      %v632 = vmul.f32 %v291, %v619
      %v633 = vmul.f32 %v292, %v619
      %v634 = vmul.f32 %v293, %v619
      %v635 = vmul.f32 %v294, %v619
      %v636 = vmul.f32 %v295, %v619
      %v637 = vmul.f32 %v296, %v619
      %v638 = vmul.f32 %v297, %v619
      %v639 = vmul.f32 %v298, %v619
      %v640 = vmul.f32 %v299, %v619
      %v641 = vmul.f32 %v300, %v619
      %v642 = vmul.f32 %v301, %v619
      %v643 = vmul.f32 %v302, %v619
      %v644 = vmul.f32 %v303, %v619
      %v645 = vmul.f32 %v304, %v619
      %v646 = vmul.f32 %v305, %v619
      %v647 = vmul.f32 %v306, %v619
      %v648 = vmul.f32 %v307, %v619
      %v649 = vmul.f32 %v308, %v619
      %v650 = vmul.f32 %v309, %v619
      %v651 = vmul.f32 %v310, %v619
      %v652 = vmul.f32 %v311, %v619
      %v653 = vmul.f32 %v312, %v619
      %v654 = vmul.f32 %v313, %v619
      %v655 = vmul.f32 %v314, %v619
      %v656 = vmul.f32 %v315, %v619
      %v657 = vmul.f32 %v316, %v619
      %v658 = vmul.f32 %v317, %v619
      %v659 = vmul.f32 %v318, %v619
      %v660 = vmul.f32 %v319, %v619
      %v661 = vmul.f32 %v320, %v619
      %v662 = vmul.f32 %v321, %v619
      %v663 = vmul.f32 %v322, %v619
      %v664 = vmul.f32 %v323, %v619
      %v665 = vmul.f32 %v324, %v619
      %v666 = vmul.f32 %v325, %v619
      %v667 = vmul.f32 %v326, %v619
      %vm716 = vcmask 1045504
      %v717 = vrot.slane %v620, 2
      %v718 = vrot.slane %v621, 2
      %v719 = vsel %vm716, %v717, %v718
      %v720 = vrot.slane %v622, 2
      %v721 = vsel %vm716, %v718, %v720
      %v722 = vrot.slane %v623, 2
      %v723 = vrot.slane %v624, 2
      %v724 = vsel %vm716, %v722, %v723
      %v725 = vrot.slane %v625, 2
      %v726 = vsel %vm716, %v723, %v725
      %v727 = vrot.slane %v626, 2
      %v728 = vrot.slane %v627, 2
      %v729 = vsel %vm716, %v727, %v728
      %v730 = vrot.slane %v628, 2
      %v731 = vsel %vm716, %v728, %v730
      %v732 = vrot.slane %v629, 2
      %v733 = vrot.slane %v630, 2
      %v734 = vsel %vm716, %v732, %v733
      %v735 = vrot.slane %v631, 2
      %v736 = vsel %vm716, %v733, %v735
      %v737 = vrot.slane %v632, 2
      %v738 = vrot.slane %v633, 2
      %v739 = vsel %vm716, %v737, %v738
      %v740 = vrot.slane %v634, 2
      %v741 = vsel %vm716, %v738, %v740
      %v742 = vrot.slane %v635, 2
      %v743 = vrot.slane %v636, 2
      %v744 = vsel %vm716, %v742, %v743
      %v745 = vrot.slane %v637, 2
      %v746 = vsel %vm716, %v743, %v745
      %v747 = vrot.slane %v638, 2
      %v748 = vrot.slane %v639, 2
      %v749 = vsel %vm716, %v747, %v748
      %v750 = vrot.slane %v640, 2
      %v751 = vsel %vm716, %v748, %v750
      %v752 = vrot.slane %v641, 2
      %v753 = vrot.slane %v642, 2
      %v754 = vsel %vm716, %v752, %v753
      %v755 = vrot.slane %v643, 2
      %v756 = vsel %vm716, %v753, %v755
      %v757 = vrot.slane %v644, 2
      %v758 = vrot.slane %v645, 2
      %v759 = vsel %vm716, %v757, %v758
      %v760 = vrot.slane %v646, 2
      %v761 = vsel %vm716, %v758, %v760
      %v762 = vrot.slane %v647, 2
      %v763 = vrot.slane %v648, 2
      %v764 = vsel %vm716, %v762, %v763
      %v765 = vrot.slane %v649, 2
      %v766 = vsel %vm716, %v763, %v765
      %v767 = vrot.slane %v650, 2
      %v768 = vrot.slane %v651, 2
      %v769 = vsel %vm716, %v767, %v768
      %v770 = vrot.slane %v652, 2
      %v771 = vsel %vm716, %v768, %v770
      %v772 = vrot.slane %v653, 2
      %v773 = vrot.slane %v654, 2
      %v774 = vsel %vm716, %v772, %v773
      %v775 = vrot.slane %v655, 2
      %v776 = vsel %vm716, %v773, %v775
      %v777 = vrot.slane %v656, 2
      %v778 = vrot.slane %v657, 2
      %v779 = vsel %vm716, %v777, %v778
      %v780 = vrot.slane %v658, 2
      %v781 = vsel %vm716, %v778, %v780
      %v782 = vrot.slane %v659, 2
      %v783 = vrot.slane %v660, 2
      %v784 = vsel %vm716, %v782, %v783
      %v785 = vrot.slane %v661, 2
      %v786 = vsel %vm716, %v783, %v785
      %v787 = vrot.slane %v662, 2
      %v788 = vrot.slane %v663, 2
      %v789 = vsel %vm716, %v787, %v788
      %v790 = vrot.slane %v664, 2
      %v791 = vsel %vm716, %v788, %v790
      %v792 = vrot.slane %v665, 2
      %v793 = vrot.slane %v666, 2
      %v794 = vsel %vm716, %v792, %v793
      %v795 = vrot.slane %v667, 2
      %v796 = vsel %vm716, %v793, %v795
      %v829 = vadd.f32 %v584, %v719
      %v830 = vadd.f32 %v585, %v721
      %v831 = vadd.f32 %v586, %v724
      %v832 = vadd.f32 %v587, %v726
      %v833 = vadd.f32 %v588, %v729
      %v834 = vadd.f32 %v589, %v731
      %v835 = vadd.f32 %v590, %v734
      %v836 = vadd.f32 %v591, %v736
      %v837 = vadd.f32 %v592, %v739
      %v838 = vadd.f32 %v593, %v741
      %v839 = vadd.f32 %v594, %v744
      %v840 = vadd.f32 %v595, %v746
      %v841 = vadd.f32 %v596, %v749
      %v842 = vadd.f32 %v597, %v751
      %v843 = vadd.f32 %v598, %v754
      %v844 = vadd.f32 %v599, %v756
      %v845 = vadd.f32 %v600, %v759
      %v846 = vadd.f32 %v601, %v761
      %v847 = vadd.f32 %v602, %v764
      %v848 = vadd.f32 %v603, %v766
      %v849 = vadd.f32 %v604, %v769
      %v850 = vadd.f32 %v605, %v771
      %v851 = vadd.f32 %v606, %v774
      %v852 = vadd.f32 %v607, %v776
      %v853 = vadd.f32 %v608, %v779
      %v854 = vadd.f32 %v609, %v781
      %v855 = vadd.f32 %v610, %v784
      %v856 = vadd.f32 %v611, %v786
      %v857 = vadd.f32 %v612, %v789
      %v858 = vadd.f32 %v613, %v791
      %v859 = vadd.f32 %v614, %v794
      %v860 = vadd.f32 %v615, %v796
      %v861 = vlaneseq
      %v862 = vshrl.u32 %v861, 7
      %v863 = vsub.s32 3, %v862
      %v864 = vrot.slane %v333, %v863
      %v865 = vmul.f32 %v282, %v864
      %v866 = vmul.f32 %v283, %v864
      %v867 = vmul.f32 %v285, %v864
      %v868 = vmul.f32 %v286, %v864
      %v869 = vmul.f32 %v288, %v864
      %v870 = vmul.f32 %v289, %v864
      %v871 = vmul.f32 %v291, %v864
      %v872 = vmul.f32 %v292, %v864
      %v873 = vmul.f32 %v294, %v864
      %v874 = vmul.f32 %v295, %v864
      %v875 = vmul.f32 %v297, %v864
      %v876 = vmul.f32 %v298, %v864
      %v877 = vmul.f32 %v300, %v864
      %v878 = vmul.f32 %v301, %v864
      %v879 = vmul.f32 %v303, %v864
      %v880 = vmul.f32 %v304, %v864
      %v881 = vmul.f32 %v306, %v864
      %v882 = vmul.f32 %v307, %v864
      %v883 = vmul.f32 %v309, %v864
      %v884 = vmul.f32 %v310, %v864
      %v885 = vmul.f32 %v312, %v864
      %v886 = vmul.f32 %v313, %v864
      %v887 = vmul.f32 %v315, %v864
      %v888 = vmul.f32 %v316, %v864
      %v889 = vmul.f32 %v318, %v864
      %v890 = vmul.f32 %v319, %v864
      %v891 = vmul.f32 %v321, %v864
      %v892 = vmul.f32 %v322, %v864
      %v893 = vmul.f32 %v324, %v864
      %v894 = vmul.f32 %v325, %v864
      %v895 = vmul.f32 %v327, %v864
      %v896 = vmul.f32 %v328, %v864
      %v897 = vadd.f32 %v829, %v865
      %v898 = vadd.f32 %v830, %v866
      %v899 = vadd.f32 %v831, %v867
      %v900 = vadd.f32 %v832, %v868
      %v901 = vadd.f32 %v833, %v869
      %v902 = vadd.f32 %v834, %v870
      %v903 = vadd.f32 %v835, %v871
      %v904 = vadd.f32 %v836, %v872
      %v905 = vadd.f32 %v837, %v873
      %v906 = vadd.f32 %v838, %v874
      %v907 = vadd.f32 %v839, %v875
      %v908 = vadd.f32 %v840, %v876
      %v909 = vadd.f32 %v841, %v877
      %v910 = vadd.f32 %v842, %v878
      %v911 = vadd.f32 %v843, %v879
      %v912 = vadd.f32 %v844, %v880
      %v913 = vadd.f32 %v845, %v881
      %v914 = vadd.f32 %v846, %v882
      %v915 = vadd.f32 %v847, %v883
      %v916 = vadd.f32 %v848, %v884
      %v917 = vadd.f32 %v849, %v885
      %v918 = vadd.f32 %v850, %v886
      %v919 = vadd.f32 %v851, %v887
      %v920 = vadd.f32 %v852, %v888
      %v921 = vadd.f32 %v853, %v889
      %v922 = vadd.f32 %v854, %v890
      %v923 = vadd.f32 %v855, %v891
      %v924 = vadd.f32 %v856, %v892
      %v925 = vadd.f32 %v857, %v893
      %v926 = vadd.f32 %v858, %v894
      %v927 = vadd.f32 %v859, %v895
      %v928 = vadd.f32 %v860, %v896
      %v929 = vlaneseq
      %v930 = vshrl.u32 %v929, 7
      %v931 = vsub.s32 4, %v930
      %v932 = vrot.slane %v333, %v931
      %v933 = vmul.f32 %v282, %v932
      %v934 = vmul.f32 %v283, %v932
      %v935 = vmul.f32 %v284, %v932
      %v936 = vmul.f32 %v285, %v932
      %v937 = vmul.f32 %v286, %v932
      %v938 = vmul.f32 %v287, %v932
      %v939 = vmul.f32 %v288, %v932
      %v940 = vmul.f32 %v289, %v932
      %v941 = vmul.f32 %v290, %v932
      %v942 = vmul.f32 %v291, %v932
      %v943 = vmul.f32 %v292, %v932
      %v944 = vmul.f32 %v293, %v932
      %v945 = vmul.f32 %v294, %v932
      %v946 = vmul.f32 %v295, %v932
      %v947 = vmul.f32 %v296, %v932
      %v948 = vmul.f32 %v297, %v932
      %v949 = vmul.f32 %v298, %v932
      %v950 = vmul.f32 %v299, %v932
      %v951 = vmul.f32 %v300, %v932
      %v952 = vmul.f32 %v301, %v932
      %v953 = vmul.f32 %v302, %v932
      %v954 = vmul.f32 %v303, %v932
      %v955 = vmul.f32 %v304, %v932
      %v956 = vmul.f32 %v305, %v932
      %v957 = vmul.f32 %v306, %v932
      %v958 = vmul.f32 %v307, %v932
      %v959 = vmul.f32 %v308, %v932
      %v960 = vmul.f32 %v309, %v932
      %v961 = vmul.f32 %v310, %v932
      %v962 = vmul.f32 %v311, %v932
      %v963 = vmul.f32 %v312, %v932
      %v964 = vmul.f32 %v313, %v932
      %v965 = vmul.f32 %v314, %v932
      %v966 = vmul.f32 %v315, %v932
      %v967 = vmul.f32 %v316, %v932
      %v968 = vmul.f32 %v317, %v932
      %v969 = vmul.f32 %v318, %v932
      %v970 = vmul.f32 %v319, %v932
      %v971 = vmul.f32 %v320, %v932
      %v972 = vmul.f32 %v321, %v932
      %v973 = vmul.f32 %v322, %v932
      %v974 = vmul.f32 %v323, %v932
      %v975 = vmul.f32 %v324, %v932
      %v976 = vmul.f32 %v325, %v932
      %v977 = vmul.f32 %v326, %v932
      %v978 = vmul.f32 %v327, %v932
      %v979 = vmul.f32 %v328, %v932
      %v980 = vmul.f32 %v329, %v932
      %v1029 = vrot.slane %v933, 1
      %v1030 = vrot.slane %v934, 1
      %v1031 = vsel %vm471, %v1029, %v1030
      %v1032 = vrot.slane %v935, 1
      %v1033 = vsel %vm471, %v1030, %v1032
      %v1034 = vrot.slane %v936, 1
      %v1035 = vrot.slane %v937, 1
      %v1036 = vsel %vm471, %v1034, %v1035
      %v1037 = vrot.slane %v938, 1
      %v1038 = vsel %vm471, %v1035, %v1037
      %v1039 = vrot.slane %v939, 1
      %v1040 = vrot.slane %v940, 1
      %v1041 = vsel %vm471, %v1039, %v1040
      %v1042 = vrot.slane %v941, 1
      %v1043 = vsel %vm471, %v1040, %v1042
      %v1044 = vrot.slane %v942, 1
      %v1045 = vrot.slane %v943, 1
      %v1046 = vsel %vm471, %v1044, %v1045
      %v1047 = vrot.slane %v944, 1
      %v1048 = vsel %vm471, %v1045, %v1047
      %v1049 = vrot.slane %v945, 1
      %v1050 = vrot.slane %v946, 1
      %v1051 = vsel %vm471, %v1049, %v1050
      %v1052 = vrot.slane %v947, 1
      %v1053 = vsel %vm471, %v1050, %v1052
      %v1054 = vrot.slane %v948, 1
      %v1055 = vrot.slane %v949, 1
      %v1056 = vsel %vm471, %v1054, %v1055
      %v1057 = vrot.slane %v950, 1
      %v1058 = vsel %vm471, %v1055, %v1057
      %v1059 = vrot.slane %v951, 1
      %v1060 = vrot.slane %v952, 1
      %v1061 = vsel %vm471, %v1059, %v1060
      %v1062 = vrot.slane %v953, 1
      %v1063 = vsel %vm471, %v1060, %v1062
      %v1064 = vrot.slane %v954, 1
      %v1065 = vrot.slane %v955, 1
      %v1066 = vsel %vm471, %v1064, %v1065
      %v1067 = vrot.slane %v956, 1
      %v1068 = vsel %vm471, %v1065, %v1067
      %v1069 = vrot.slane %v957, 1
      %v1070 = vrot.slane %v958, 1
      %v1071 = vsel %vm471, %v1069, %v1070
      %v1072 = vrot.slane %v959, 1
      %v1073 = vsel %vm471, %v1070, %v1072
      %v1074 = vrot.slane %v960, 1
      %v1075 = vrot.slane %v961, 1
      %v1076 = vsel %vm471, %v1074, %v1075
      %v1077 = vrot.slane %v962, 1
      %v1078 = vsel %vm471, %v1075, %v1077
      %v1079 = vrot.slane %v963, 1
      %v1080 = vrot.slane %v964, 1
      %v1081 = vsel %vm471, %v1079, %v1080
      %v1082 = vrot.slane %v965, 1
      %v1083 = vsel %vm471, %v1080, %v1082
      %v1084 = vrot.slane %v966, 1
      %v1085 = vrot.slane %v967, 1
      %v1086 = vsel %vm471, %v1084, %v1085
      %v1087 = vrot.slane %v968, 1
      %v1088 = vsel %vm471, %v1085, %v1087
      %v1089 = vrot.slane %v969, 1
      %v1090 = vrot.slane %v970, 1
      %v1091 = vsel %vm471, %v1089, %v1090
      %v1092 = vrot.slane %v971, 1
      %v1093 = vsel %vm471, %v1090, %v1092
      %v1094 = vrot.slane %v972, 1
      %v1095 = vrot.slane %v973, 1
      %v1096 = vsel %vm471, %v1094, %v1095
      %v1097 = vrot.slane %v974, 1
      %v1098 = vsel %vm471, %v1095, %v1097
      %v1099 = vrot.slane %v975, 1
      %v1100 = vrot.slane %v976, 1
      %v1101 = vsel %vm471, %v1099, %v1100
      %v1102 = vrot.slane %v977, 1
      %v1103 = vsel %vm471, %v1100, %v1102
      %v1104 = vrot.slane %v978, 1
      %v1105 = vrot.slane %v979, 1
      %v1106 = vsel %vm471, %v1104, %v1105
      %v1107 = vrot.slane %v980, 1
      %v1108 = vsel %vm471, %v1105, %v1107
      %v1141 = vadd.f32 %v897, %v1031
      %v1142 = vadd.f32 %v898, %v1033
      %v1143 = vadd.f32 %v899, %v1036
      %v1144 = vadd.f32 %v900, %v1038
      %v1145 = vadd.f32 %v901, %v1041
      %v1146 = vadd.f32 %v902, %v1043
      %v1147 = vadd.f32 %v903, %v1046
      %v1148 = vadd.f32 %v904, %v1048
      %v1149 = vadd.f32 %v905, %v1051
      %v1150 = vadd.f32 %v906, %v1053
      %v1151 = vadd.f32 %v907, %v1056
      %v1152 = vadd.f32 %v908, %v1058
      %v1153 = vadd.f32 %v909, %v1061
      %v1154 = vadd.f32 %v910, %v1063
      %v1155 = vadd.f32 %v911, %v1066
      %v1156 = vadd.f32 %v912, %v1068
      %v1157 = vadd.f32 %v913, %v1071
      %v1158 = vadd.f32 %v914, %v1073
      %v1159 = vadd.f32 %v915, %v1076
      %v1160 = vadd.f32 %v916, %v1078
      %v1161 = vadd.f32 %v917, %v1081
      %v1162 = vadd.f32 %v918, %v1083
      %v1163 = vadd.f32 %v919, %v1086
      %v1164 = vadd.f32 %v920, %v1088
      %v1165 = vadd.f32 %v921, %v1091
      %v1166 = vadd.f32 %v922, %v1093
      %v1167 = vadd.f32 %v923, %v1096
      %v1168 = vadd.f32 %v924, %v1098
      %v1169 = vadd.f32 %v925, %v1101
      %v1170 = vadd.f32 %v926, %v1103
      %v1171 = vadd.f32 %v927, %v1106
      %v1172 = vadd.f32 %v928, %v1108
      %v1173 = vlaneseq
      %v1174 = vshrl.u32 %v1173, 7
      %v1175 = vsub.s32 5, %v1174
      %v1176 = vrot.slane %v333, %v1175
      %v1177 = vmul.f32 %v282, %v1176
      %v1178 = vmul.f32 %v283, %v1176
      %v1179 = vmul.f32 %v284, %v1176
      %v1180 = vmul.f32 %v285, %v1176
      %v1181 = vmul.f32 %v286, %v1176
      %v1182 = vmul.f32 %v287, %v1176
      %v1183 = vmul.f32 %v288, %v1176
      %v1184 = vmul.f32 %v289, %v1176
      %v1185 = vmul.f32 %v290, %v1176
      %v1186 = vmul.f32 %v291, %v1176
      %v1187 = vmul.f32 %v292, %v1176
      %v1188 = vmul.f32 %v293, %v1176
      %v1189 = vmul.f32 %v294, %v1176
      %v1190 = vmul.f32 %v295, %v1176
      %v1191 = vmul.f32 %v296, %v1176
      %v1192 = vmul.f32 %v297, %v1176
      %v1193 = vmul.f32 %v298, %v1176
      %v1194 = vmul.f32 %v299, %v1176
      %v1195 = vmul.f32 %v300, %v1176
      %v1196 = vmul.f32 %v301, %v1176
      %v1197 = vmul.f32 %v302, %v1176
      %v1198 = vmul.f32 %v303, %v1176
      %v1199 = vmul.f32 %v304, %v1176
      %v1200 = vmul.f32 %v305, %v1176
      %v1201 = vmul.f32 %v306, %v1176
      %v1202 = vmul.f32 %v307, %v1176
      %v1203 = vmul.f32 %v308, %v1176
      %v1204 = vmul.f32 %v309, %v1176
      %v1205 = vmul.f32 %v310, %v1176
      %v1206 = vmul.f32 %v311, %v1176
      %v1207 = vmul.f32 %v312, %v1176
      %v1208 = vmul.f32 %v313, %v1176
      %v1209 = vmul.f32 %v314, %v1176
      %v1210 = vmul.f32 %v315, %v1176
      %v1211 = vmul.f32 %v316, %v1176
      %v1212 = vmul.f32 %v317, %v1176
      %v1213 = vmul.f32 %v318, %v1176
      %v1214 = vmul.f32 %v319, %v1176
      %v1215 = vmul.f32 %v320, %v1176
      %v1216 = vmul.f32 %v321, %v1176
      %v1217 = vmul.f32 %v322, %v1176
      %v1218 = vmul.f32 %v323, %v1176
      %v1219 = vmul.f32 %v324, %v1176
      %v1220 = vmul.f32 %v325, %v1176
      %v1221 = vmul.f32 %v326, %v1176
      %v1222 = vmul.f32 %v327, %v1176
      %v1223 = vmul.f32 %v328, %v1176
      %v1224 = vmul.f32 %v329, %v1176
      %v1273 = vrot.slane %v1177, 2
      %v1274 = vrot.slane %v1178, 2
      %v1275 = vsel %vm716, %v1273, %v1274
      %v1276 = vrot.slane %v1179, 2
      %v1277 = vsel %vm716, %v1274, %v1276
      %v1278 = vrot.slane %v1180, 2
      %v1279 = vrot.slane %v1181, 2
      %v1280 = vsel %vm716, %v1278, %v1279
      %v1281 = vrot.slane %v1182, 2
      %v1282 = vsel %vm716, %v1279, %v1281
      %v1283 = vrot.slane %v1183, 2
      %v1284 = vrot.slane %v1184, 2
      %v1285 = vsel %vm716, %v1283, %v1284
      %v1286 = vrot.slane %v1185, 2
      %v1287 = vsel %vm716, %v1284, %v1286
      %v1288 = vrot.slane %v1186, 2
      %v1289 = vrot.slane %v1187, 2
      %v1290 = vsel %vm716, %v1288, %v1289
      %v1291 = vrot.slane %v1188, 2
      %v1292 = vsel %vm716, %v1289, %v1291
      %v1293 = vrot.slane %v1189, 2
      %v1294 = vrot.slane %v1190, 2
      %v1295 = vsel %vm716, %v1293, %v1294
      %v1296 = vrot.slane %v1191, 2
      %v1297 = vsel %vm716, %v1294, %v1296
      %v1298 = vrot.slane %v1192, 2
      %v1299 = vrot.slane %v1193, 2
      %v1300 = vsel %vm716, %v1298, %v1299
      %v1301 = vrot.slane %v1194, 2
      %v1302 = vsel %vm716, %v1299, %v1301
      %v1303 = vrot.slane %v1195, 2
      %v1304 = vrot.slane %v1196, 2
      %v1305 = vsel %vm716, %v1303, %v1304
      %v1306 = vrot.slane %v1197, 2
      %v1307 = vsel %vm716, %v1304, %v1306
      %v1308 = vrot.slane %v1198, 2
      %v1309 = vrot.slane %v1199, 2
      %v1310 = vsel %vm716, %v1308, %v1309
      %v1311 = vrot.slane %v1200, 2
      %v1312 = vsel %vm716, %v1309, %v1311
      %v1313 = vrot.slane %v1201, 2
      %v1314 = vrot.slane %v1202, 2
      %v1315 = vsel %vm716, %v1313, %v1314
      %v1316 = vrot.slane %v1203, 2
      %v1317 = vsel %vm716, %v1314, %v1316
      %v1318 = vrot.slane %v1204, 2
      %v1319 = vrot.slane %v1205, 2
      %v1320 = vsel %vm716, %v1318, %v1319
      %v1321 = vrot.slane %v1206, 2
      %v1322 = vsel %vm716, %v1319, %v1321
      %v1323 = vrot.slane %v1207, 2
      %v1324 = vrot.slane %v1208, 2
      %v1325 = vsel %vm716, %v1323, %v1324
      %v1326 = vrot.slane %v1209, 2
      %v1327 = vsel %vm716, %v1324, %v1326
      %v1328 = vrot.slane %v1210, 2
      %v1329 = vrot.slane %v1211, 2
      %v1330 = vsel %vm716, %v1328, %v1329
      %v1331 = vrot.slane %v1212, 2
      %v1332 = vsel %vm716, %v1329, %v1331
      %v1333 = vrot.slane %v1213, 2
      %v1334 = vrot.slane %v1214, 2
      %v1335 = vsel %vm716, %v1333, %v1334
      %v1336 = vrot.slane %v1215, 2
      %v1337 = vsel %vm716, %v1334, %v1336
      %v1338 = vrot.slane %v1216, 2
      %v1339 = vrot.slane %v1217, 2
      %v1340 = vsel %vm716, %v1338, %v1339
      %v1341 = vrot.slane %v1218, 2
      %v1342 = vsel %vm716, %v1339, %v1341
      %v1343 = vrot.slane %v1219, 2
      %v1344 = vrot.slane %v1220, 2
      %v1345 = vsel %vm716, %v1343, %v1344
      %v1346 = vrot.slane %v1221, 2
      %v1347 = vsel %vm716, %v1344, %v1346
      %v1348 = vrot.slane %v1222, 2
      %v1349 = vrot.slane %v1223, 2
      %v1350 = vsel %vm716, %v1348, %v1349
      %v1351 = vrot.slane %v1224, 2
      %v1352 = vsel %vm716, %v1349, %v1351
      %v1385 = vadd.f32 %v1141, %v1275
      %v1386 = vadd.f32 %v1142, %v1277
      %v1387 = vadd.f32 %v1143, %v1280
      %v1388 = vadd.f32 %v1144, %v1282
      %v1389 = vadd.f32 %v1145, %v1285
      %v1390 = vadd.f32 %v1146, %v1287
      %v1391 = vadd.f32 %v1147, %v1290
      %v1392 = vadd.f32 %v1148, %v1292
      %v1393 = vadd.f32 %v1149, %v1295
      %v1394 = vadd.f32 %v1150, %v1297
      %v1395 = vadd.f32 %v1151, %v1300
      %v1396 = vadd.f32 %v1152, %v1302
      %v1397 = vadd.f32 %v1153, %v1305
      %v1398 = vadd.f32 %v1154, %v1307
      %v1399 = vadd.f32 %v1155, %v1310
      %v1400 = vadd.f32 %v1156, %v1312
      %v1401 = vadd.f32 %v1157, %v1315
      %v1402 = vadd.f32 %v1158, %v1317
      %v1403 = vadd.f32 %v1159, %v1320
      %v1404 = vadd.f32 %v1160, %v1322
      %v1405 = vadd.f32 %v1161, %v1325
      %v1406 = vadd.f32 %v1162, %v1327
      %v1407 = vadd.f32 %v1163, %v1330
      %v1408 = vadd.f32 %v1164, %v1332
      %v1409 = vadd.f32 %v1165, %v1335
      %v1410 = vadd.f32 %v1166, %v1337
      %v1411 = vadd.f32 %v1167, %v1340
      %v1412 = vadd.f32 %v1168, %v1342
      %v1413 = vadd.f32 %v1169, %v1345
      %v1414 = vadd.f32 %v1170, %v1347
      %v1415 = vadd.f32 %v1171, %v1350
      %v1416 = vadd.f32 %v1172, %v1352
      %v1417 = vlaneseq
      %v1418 = vshrl.u32 %v1417, 7
      %v1419 = vsub.s32 6, %v1418
      %v1420 = vrot.slane %v333, %v1419
      %v1421 = vmul.f32 %v285, %v1420
      %v1422 = vmul.f32 %v286, %v1420
      %v1423 = vmul.f32 %v288, %v1420
      %v1424 = vmul.f32 %v289, %v1420
      %v1425 = vmul.f32 %v291, %v1420
      %v1426 = vmul.f32 %v292, %v1420
      %v1427 = vmul.f32 %v294, %v1420
      %v1428 = vmul.f32 %v295, %v1420
      %v1429 = vmul.f32 %v297, %v1420
      %v1430 = vmul.f32 %v298, %v1420
      %v1431 = vmul.f32 %v300, %v1420
      %v1432 = vmul.f32 %v301, %v1420
      %v1433 = vmul.f32 %v303, %v1420
      %v1434 = vmul.f32 %v304, %v1420
      %v1435 = vmul.f32 %v306, %v1420
      %v1436 = vmul.f32 %v307, %v1420
      %v1437 = vmul.f32 %v309, %v1420
      %v1438 = vmul.f32 %v310, %v1420
      %v1439 = vmul.f32 %v312, %v1420
      %v1440 = vmul.f32 %v313, %v1420
      %v1441 = vmul.f32 %v315, %v1420
      %v1442 = vmul.f32 %v316, %v1420
      %v1443 = vmul.f32 %v318, %v1420
      %v1444 = vmul.f32 %v319, %v1420
      %v1445 = vmul.f32 %v321, %v1420
      %v1446 = vmul.f32 %v322, %v1420
      %v1447 = vmul.f32 %v324, %v1420
      %v1448 = vmul.f32 %v325, %v1420
      %v1449 = vmul.f32 %v327, %v1420
      %v1450 = vmul.f32 %v328, %v1420
      %v1451 = vmul.f32 %v330, %v1420
      %v1452 = vmul.f32 %v331, %v1420
      %v1453 = vadd.f32 %v1385, %v1421
      %v1454 = vadd.f32 %v1386, %v1422
      %v1455 = vadd.f32 %v1387, %v1423
      %v1456 = vadd.f32 %v1388, %v1424
      %v1457 = vadd.f32 %v1389, %v1425
      %v1458 = vadd.f32 %v1390, %v1426
      %v1459 = vadd.f32 %v1391, %v1427
      %v1460 = vadd.f32 %v1392, %v1428
      %v1461 = vadd.f32 %v1393, %v1429
      %v1462 = vadd.f32 %v1394, %v1430
      %v1463 = vadd.f32 %v1395, %v1431
      %v1464 = vadd.f32 %v1396, %v1432
      %v1465 = vadd.f32 %v1397, %v1433
      %v1466 = vadd.f32 %v1398, %v1434
      %v1467 = vadd.f32 %v1399, %v1435
      %v1468 = vadd.f32 %v1400, %v1436
      %v1469 = vadd.f32 %v1401, %v1437
      %v1470 = vadd.f32 %v1402, %v1438
      %v1471 = vadd.f32 %v1403, %v1439
      %v1472 = vadd.f32 %v1404, %v1440
      %v1473 = vadd.f32 %v1405, %v1441
      %v1474 = vadd.f32 %v1406, %v1442
      %v1475 = vadd.f32 %v1407, %v1443
      %v1476 = vadd.f32 %v1408, %v1444
      %v1477 = vadd.f32 %v1409, %v1445
      %v1478 = vadd.f32 %v1410, %v1446
      %v1479 = vadd.f32 %v1411, %v1447
      %v1480 = vadd.f32 %v1412, %v1448
      %v1481 = vadd.f32 %v1413, %v1449
      %v1482 = vadd.f32 %v1414, %v1450
      %v1483 = vadd.f32 %v1415, %v1451
      %v1484 = vadd.f32 %v1416, %v1452
      %v1485 = vlaneseq
      %v1486 = vshrl.u32 %v1485, 7
      %v1487 = vsub.s32 7, %v1486
      %v1488 = vrot.slane %v333, %v1487
      %v1489 = vmul.f32 %v285, %v1488
      %v1490 = vmul.f32 %v286, %v1488
      %v1491 = vmul.f32 %v287, %v1488
      %v1492 = vmul.f32 %v288, %v1488
      %v1493 = vmul.f32 %v289, %v1488
      %v1494 = vmul.f32 %v290, %v1488
      %v1495 = vmul.f32 %v291, %v1488
      %v1496 = vmul.f32 %v292, %v1488
      %v1497 = vmul.f32 %v293, %v1488
      %v1498 = vmul.f32 %v294, %v1488
      %v1499 = vmul.f32 %v295, %v1488
      %v1500 = vmul.f32 %v296, %v1488
      %v1501 = vmul.f32 %v297, %v1488
      %v1502 = vmul.f32 %v298, %v1488
      %v1503 = vmul.f32 %v299, %v1488
      %v1504 = vmul.f32 %v300, %v1488
      %v1505 = vmul.f32 %v301, %v1488
      %v1506 = vmul.f32 %v302, %v1488
      %v1507 = vmul.f32 %v303, %v1488
      %v1508 = vmul.f32 %v304, %v1488
      %v1509 = vmul.f32 %v305, %v1488
      %v1510 = vmul.f32 %v306, %v1488
      %v1511 = vmul.f32 %v307, %v1488
      %v1512 = vmul.f32 %v308, %v1488
      %v1513 = vmul.f32 %v309, %v1488
      %v1514 = vmul.f32 %v310, %v1488
      %v1515 = vmul.f32 %v311, %v1488
      %v1516 = vmul.f32 %v312, %v1488
      %v1517 = vmul.f32 %v313, %v1488
      %v1518 = vmul.f32 %v314, %v1488
      %v1519 = vmul.f32 %v315, %v1488
      %v1520 = vmul.f32 %v316, %v1488
      %v1521 = vmul.f32 %v317, %v1488
      %v1522 = vmul.f32 %v318, %v1488
      %v1523 = vmul.f32 %v319, %v1488
      %v1524 = vmul.f32 %v320, %v1488
      %v1525 = vmul.f32 %v321, %v1488
      %v1526 = vmul.f32 %v322, %v1488
      %v1527 = vmul.f32 %v323, %v1488
      %v1528 = vmul.f32 %v324, %v1488
      %v1529 = vmul.f32 %v325, %v1488
      %v1530 = vmul.f32 %v326, %v1488
      %v1531 = vmul.f32 %v327, %v1488
      %v1532 = vmul.f32 %v328, %v1488
      %v1533 = vmul.f32 %v329, %v1488
      %v1534 = vmul.f32 %v330, %v1488
      %v1535 = vmul.f32 %v331, %v1488
      %v1536 = vmul.f32 %v332, %v1488
      %v1585 = vrot.slane %v1489, 1
      %v1586 = vrot.slane %v1490, 1
      %v1587 = vsel %vm471, %v1585, %v1586
      %v1588 = vrot.slane %v1491, 1
      %v1589 = vsel %vm471, %v1586, %v1588
      %v1590 = vrot.slane %v1492, 1
      %v1591 = vrot.slane %v1493, 1
      %v1592 = vsel %vm471, %v1590, %v1591
      %v1593 = vrot.slane %v1494, 1
      %v1594 = vsel %vm471, %v1591, %v1593
      %v1595 = vrot.slane %v1495, 1
      %v1596 = vrot.slane %v1496, 1
      %v1597 = vsel %vm471, %v1595, %v1596
      %v1598 = vrot.slane %v1497, 1
      %v1599 = vsel %vm471, %v1596, %v1598
      %v1600 = vrot.slane %v1498, 1
      %v1601 = vrot.slane %v1499, 1
      %v1602 = vsel %vm471, %v1600, %v1601
      %v1603 = vrot.slane %v1500, 1
      %v1604 = vsel %vm471, %v1601, %v1603
      %v1605 = vrot.slane %v1501, 1
      %v1606 = vrot.slane %v1502, 1
      %v1607 = vsel %vm471, %v1605, %v1606
      %v1608 = vrot.slane %v1503, 1
      %v1609 = vsel %vm471, %v1606, %v1608
      %v1610 = vrot.slane %v1504, 1
      %v1611 = vrot.slane %v1505, 1
      %v1612 = vsel %vm471, %v1610, %v1611
      %v1613 = vrot.slane %v1506, 1
      %v1614 = vsel %vm471, %v1611, %v1613
      %v1615 = vrot.slane %v1507, 1
      %v1616 = vrot.slane %v1508, 1
      %v1617 = vsel %vm471, %v1615, %v1616
      %v1618 = vrot.slane %v1509, 1
      %v1619 = vsel %vm471, %v1616, %v1618
      %v1620 = vrot.slane %v1510, 1
      %v1621 = vrot.slane %v1511, 1
      %v1622 = vsel %vm471, %v1620, %v1621
      %v1623 = vrot.slane %v1512, 1
      %v1624 = vsel %vm471, %v1621, %v1623
      %v1625 = vrot.slane %v1513, 1
      %v1626 = vrot.slane %v1514, 1
      %v1627 = vsel %vm471, %v1625, %v1626
      %v1628 = vrot.slane %v1515, 1
      %v1629 = vsel %vm471, %v1626, %v1628
      %v1630 = vrot.slane %v1516, 1
      %v1631 = vrot.slane %v1517, 1
      %v1632 = vsel %vm471, %v1630, %v1631
      %v1633 = vrot.slane %v1518, 1
      %v1634 = vsel %vm471, %v1631, %v1633
      %v1635 = vrot.slane %v1519, 1
      %v1636 = vrot.slane %v1520, 1
      %v1637 = vsel %vm471, %v1635, %v1636
      %v1638 = vrot.slane %v1521, 1
      %v1639 = vsel %vm471, %v1636, %v1638
      %v1640 = vrot.slane %v1522, 1
      %v1641 = vrot.slane %v1523, 1
      %v1642 = vsel %vm471, %v1640, %v1641
      %v1643 = vrot.slane %v1524, 1
      %v1644 = vsel %vm471, %v1641, %v1643
      %v1645 = vrot.slane %v1525, 1
      %v1646 = vrot.slane %v1526, 1
      %v1647 = vsel %vm471, %v1645, %v1646
      %v1648 = vrot.slane %v1527, 1
      %v1649 = vsel %vm471, %v1646, %v1648
      %v1650 = vrot.slane %v1528, 1
      %v1651 = vrot.slane %v1529, 1
      %v1652 = vsel %vm471, %v1650, %v1651
      %v1653 = vrot.slane %v1530, 1
      %v1654 = vsel %vm471, %v1651, %v1653
      %v1655 = vrot.slane %v1531, 1
      %v1656 = vrot.slane %v1532, 1
      %v1657 = vsel %vm471, %v1655, %v1656
      %v1658 = vrot.slane %v1533, 1
      %v1659 = vsel %vm471, %v1656, %v1658
      %v1660 = vrot.slane %v1534, 1
      %v1661 = vrot.slane %v1535, 1
      %v1662 = vsel %vm471, %v1660, %v1661
      %v1663 = vrot.slane %v1536, 1
      %v1664 = vsel %vm471, %v1661, %v1663
      %v1697 = vadd.f32 %v1453, %v1587
      %v1698 = vadd.f32 %v1454, %v1589
      %v1699 = vadd.f32 %v1455, %v1592
      %v1700 = vadd.f32 %v1456, %v1594
      %v1701 = vadd.f32 %v1457, %v1597
      %v1702 = vadd.f32 %v1458, %v1599
      %v1703 = vadd.f32 %v1459, %v1602
      %v1704 = vadd.f32 %v1460, %v1604
      %v1705 = vadd.f32 %v1461, %v1607
      %v1706 = vadd.f32 %v1462, %v1609
      %v1707 = vadd.f32 %v1463, %v1612
      %v1708 = vadd.f32 %v1464, %v1614
      %v1709 = vadd.f32 %v1465, %v1617
      %v1710 = vadd.f32 %v1466, %v1619
      %v1711 = vadd.f32 %v1467, %v1622
      %v1712 = vadd.f32 %v1468, %v1624
      %v1713 = vadd.f32 %v1469, %v1627
      %v1714 = vadd.f32 %v1470, %v1629
      %v1715 = vadd.f32 %v1471, %v1632
      %v1716 = vadd.f32 %v1472, %v1634
      %v1717 = vadd.f32 %v1473, %v1637
      %v1718 = vadd.f32 %v1474, %v1639
      %v1719 = vadd.f32 %v1475, %v1642
      %v1720 = vadd.f32 %v1476, %v1644
      %v1721 = vadd.f32 %v1477, %v1647
      %v1722 = vadd.f32 %v1478, %v1649
      %v1723 = vadd.f32 %v1479, %v1652
      %v1724 = vadd.f32 %v1480, %v1654
      %v1725 = vadd.f32 %v1481, %v1657
      %v1726 = vadd.f32 %v1482, %v1659
      %v1727 = vadd.f32 %v1483, %v1662
      %v1728 = vadd.f32 %v1484, %v1664
      %v1729 = vlaneseq
      %v1730 = vshrl.u32 %v1729, 7
      %v1731 = vsub.s32 0, %v1730
      %v1732 = vrot.slane %v334, %v1731
      %v1733 = vmul.f32 %v285, %v1732
      %v1734 = vmul.f32 %v286, %v1732
      %v1735 = vmul.f32 %v287, %v1732
      %v1736 = vmul.f32 %v288, %v1732
      %v1737 = vmul.f32 %v289, %v1732
      %v1738 = vmul.f32 %v290, %v1732
      %v1739 = vmul.f32 %v291, %v1732
      %v1740 = vmul.f32 %v292, %v1732
      %v1741 = vmul.f32 %v293, %v1732
      %v1742 = vmul.f32 %v294, %v1732
      %v1743 = vmul.f32 %v295, %v1732
      %v1744 = vmul.f32 %v296, %v1732
      %v1745 = vmul.f32 %v297, %v1732
      %v1746 = vmul.f32 %v298, %v1732
      %v1747 = vmul.f32 %v299, %v1732
      %v1748 = vmul.f32 %v300, %v1732
      %v1749 = vmul.f32 %v301, %v1732
      %v1750 = vmul.f32 %v302, %v1732
      %v1751 = vmul.f32 %v303, %v1732
      %v1752 = vmul.f32 %v304, %v1732
      %v1753 = vmul.f32 %v305, %v1732
      %v1754 = vmul.f32 %v306, %v1732
      %v1755 = vmul.f32 %v307, %v1732
      %v1756 = vmul.f32 %v308, %v1732
      %v1757 = vmul.f32 %v309, %v1732
      %v1758 = vmul.f32 %v310, %v1732
      %v1759 = vmul.f32 %v311, %v1732
      %v1760 = vmul.f32 %v312, %v1732
      %v1761 = vmul.f32 %v313, %v1732
      %v1762 = vmul.f32 %v314, %v1732
      %v1763 = vmul.f32 %v315, %v1732
      %v1764 = vmul.f32 %v316, %v1732
      %v1765 = vmul.f32 %v317, %v1732
      %v1766 = vmul.f32 %v318, %v1732
      %v1767 = vmul.f32 %v319, %v1732
      %v1768 = vmul.f32 %v320, %v1732
      %v1769 = vmul.f32 %v321, %v1732
      %v1770 = vmul.f32 %v322, %v1732
      %v1771 = vmul.f32 %v323, %v1732
      %v1772 = vmul.f32 %v324, %v1732
      %v1773 = vmul.f32 %v325, %v1732
      %v1774 = vmul.f32 %v326, %v1732
      %v1775 = vmul.f32 %v327, %v1732
      %v1776 = vmul.f32 %v328, %v1732
      %v1777 = vmul.f32 %v329, %v1732
      %v1778 = vmul.f32 %v330, %v1732
      %v1779 = vmul.f32 %v331, %v1732
      %v1780 = vmul.f32 %v332, %v1732
      %v1829 = vrot.slane %v1733, 2
      %v1830 = vrot.slane %v1734, 2
      %v1831 = vsel %vm716, %v1829, %v1830
      %v1832 = vrot.slane %v1735, 2
      %v1833 = vsel %vm716, %v1830, %v1832
      %v1834 = vrot.slane %v1736, 2
      %v1835 = vrot.slane %v1737, 2
      %v1836 = vsel %vm716, %v1834, %v1835
      %v1837 = vrot.slane %v1738, 2
      %v1838 = vsel %vm716, %v1835, %v1837
      %v1839 = vrot.slane %v1739, 2
      %v1840 = vrot.slane %v1740, 2
      %v1841 = vsel %vm716, %v1839, %v1840
      %v1842 = vrot.slane %v1741, 2
      %v1843 = vsel %vm716, %v1840, %v1842
      %v1844 = vrot.slane %v1742, 2
      %v1845 = vrot.slane %v1743, 2
      %v1846 = vsel %vm716, %v1844, %v1845
      %v1847 = vrot.slane %v1744, 2
      %v1848 = vsel %vm716, %v1845, %v1847
      %v1849 = vrot.slane %v1745, 2
      %v1850 = vrot.slane %v1746, 2
      %v1851 = vsel %vm716, %v1849, %v1850
      %v1852 = vrot.slane %v1747, 2
      %v1853 = vsel %vm716, %v1850, %v1852
      %v1854 = vrot.slane %v1748, 2
      %v1855 = vrot.slane %v1749, 2
      %v1856 = vsel %vm716, %v1854, %v1855
      %v1857 = vrot.slane %v1750, 2
      %v1858 = vsel %vm716, %v1855, %v1857
      %v1859 = vrot.slane %v1751, 2
      %v1860 = vrot.slane %v1752, 2
      %v1861 = vsel %vm716, %v1859, %v1860
      %v1862 = vrot.slane %v1753, 2
      %v1863 = vsel %vm716, %v1860, %v1862
      %v1864 = vrot.slane %v1754, 2
      %v1865 = vrot.slane %v1755, 2
      %v1866 = vsel %vm716, %v1864, %v1865
      %v1867 = vrot.slane %v1756, 2
      %v1868 = vsel %vm716, %v1865, %v1867
      %v1869 = vrot.slane %v1757, 2
      %v1870 = vrot.slane %v1758, 2
      %v1871 = vsel %vm716, %v1869, %v1870
      %v1872 = vrot.slane %v1759, 2
      %v1873 = vsel %vm716, %v1870, %v1872
      %v1874 = vrot.slane %v1760, 2
      %v1875 = vrot.slane %v1761, 2
      %v1876 = vsel %vm716, %v1874, %v1875
      %v1877 = vrot.slane %v1762, 2
      %v1878 = vsel %vm716, %v1875, %v1877
      %v1879 = vrot.slane %v1763, 2
      %v1880 = vrot.slane %v1764, 2
      %v1881 = vsel %vm716, %v1879, %v1880
      %v1882 = vrot.slane %v1765, 2
      %v1883 = vsel %vm716, %v1880, %v1882
      %v1884 = vrot.slane %v1766, 2
      %v1885 = vrot.slane %v1767, 2
      %v1886 = vsel %vm716, %v1884, %v1885
      %v1887 = vrot.slane %v1768, 2
      %v1888 = vsel %vm716, %v1885, %v1887
      %v1889 = vrot.slane %v1769, 2
      %v1890 = vrot.slane %v1770, 2
      %v1891 = vsel %vm716, %v1889, %v1890
      %v1892 = vrot.slane %v1771, 2
      %v1893 = vsel %vm716, %v1890, %v1892
      %v1894 = vrot.slane %v1772, 2
      %v1895 = vrot.slane %v1773, 2
      %v1896 = vsel %vm716, %v1894, %v1895
      %v1897 = vrot.slane %v1774, 2
      %v1898 = vsel %vm716, %v1895, %v1897
      %v1899 = vrot.slane %v1775, 2
      %v1900 = vrot.slane %v1776, 2
      %v1901 = vsel %vm716, %v1899, %v1900
      %v1902 = vrot.slane %v1777, 2
      %v1903 = vsel %vm716, %v1900, %v1902
      %v1904 = vrot.slane %v1778, 2
      %v1905 = vrot.slane %v1779, 2
      %v1906 = vsel %vm716, %v1904, %v1905
      %v1907 = vrot.slane %v1780, 2
      %v1908 = vsel %vm716, %v1905, %v1907
      %v1941 = vadd.f32 %v1697, %v1831
      %v1942 = vadd.f32 %v1698, %v1833
      %v1943 = vadd.f32 %v1699, %v1836
      %v1944 = vadd.f32 %v1700, %v1838
      %v1945 = vadd.f32 %v1701, %v1841
      %v1946 = vadd.f32 %v1702, %v1843
      %v1947 = vadd.f32 %v1703, %v1846
      %v1948 = vadd.f32 %v1704, %v1848
      %v1949 = vadd.f32 %v1705, %v1851
      %v1950 = vadd.f32 %v1706, %v1853
      %v1951 = vadd.f32 %v1707, %v1856
      %v1952 = vadd.f32 %v1708, %v1858
      %v1953 = vadd.f32 %v1709, %v1861
      %v1954 = vadd.f32 %v1710, %v1863
      %v1955 = vadd.f32 %v1711, %v1866
      %v1956 = vadd.f32 %v1712, %v1868
      %v1957 = vadd.f32 %v1713, %v1871
      %v1958 = vadd.f32 %v1714, %v1873
      %v1959 = vadd.f32 %v1715, %v1876
      %v1960 = vadd.f32 %v1716, %v1878
      %v1961 = vadd.f32 %v1717, %v1881
      %v1962 = vadd.f32 %v1718, %v1883
      %v1963 = vadd.f32 %v1719, %v1886
      %v1964 = vadd.f32 %v1720, %v1888
      %v1965 = vadd.f32 %v1721, %v1891
      %v1966 = vadd.f32 %v1722, %v1893
      %v1967 = vadd.f32 %v1723, %v1896
      %v1968 = vadd.f32 %v1724, %v1898
      %v1969 = vadd.f32 %v1725, %v1901
      %v1970 = vadd.f32 %v1726, %v1903
      %v1971 = vadd.f32 %v1727, %v1906
      %v1972 = vadd.f32 %v1728, %v1908
      %v1973 = vld [vmem:[%s2] sm:$0x1]
      %v1975 = vlaneseq
      %v1976 = vshrl.u32 %v1975, 7
      %v1977 = vsub.s32 0, %v1976
      %v1978 = vrot.slane %v1973, %v1977
      %v1980 = vadd.f32 %v1941, %v1978
      %v1981 = vadd.f32 %v1942, %v1978
      %v1982 = vadd.f32 %v1943, %v1978
      %v1983 = vadd.f32 %v1944, %v1978
      %v1984 = vadd.f32 %v1945, %v1978
      %v1985 = vadd.f32 %v1946, %v1978
      %v1986 = vadd.f32 %v1947, %v1978
      %v1987 = vadd.f32 %v1948, %v1978
      %v1988 = vadd.f32 %v1949, %v1978
      %v1989 = vadd.f32 %v1950, %v1978
      %v1990 = vadd.f32 %v1951, %v1978
      %v1991 = vadd.f32 %v1952, %v1978
      %v1992 = vadd.f32 %v1953, %v1978
      %v1993 = vadd.f32 %v1954, %v1978
      %v1994 = vadd.f32 %v1955, %v1978
      %v1995 = vadd.f32 %v1956, %v1978
      %v1996 = vadd.f32 %v1957, %v1978
      %v1997 = vadd.f32 %v1958, %v1978
      %v1998 = vadd.f32 %v1959, %v1978
      %v1999 = vadd.f32 %v1960, %v1978
      %v2000 = vadd.f32 %v1961, %v1978
      %v2001 = vadd.f32 %v1962, %v1978
      %v2002 = vadd.f32 %v1963, %v1978
      %v2003 = vadd.f32 %v1964, %v1978
      %v2004 = vadd.f32 %v1965, %v1978
      %v2005 = vadd.f32 %v1966, %v1978
      %v2006 = vadd.f32 %v1967, %v1978
      %v2007 = vadd.f32 %v1968, %v1978
      %v2008 = vadd.f32 %v1969, %v1978
      %v2009 = vadd.f32 %v1970, %v1978
      %v2010 = vadd.f32 %v1971, %v1978
      %v2011 = vadd.f32 %v1972, %v1978
      %vm2012 = vcmp.ge.f32.partialorder %v1980, 0.0
      %vm2013 = vcmp.ge.f32.partialorder %v1981, 0.0
      %vm2014 = vcmp.ge.f32.partialorder %v1982, 0.0
      %vm2015 = vcmp.ge.f32.partialorder %v1983, 0.0
      %vm2016 = vcmp.ge.f32.partialorder %v1984, 0.0
      %vm2017 = vcmp.ge.f32.partialorder %v1985, 0.0
      %vm2018 = vcmp.ge.f32.partialorder %v1986, 0.0
      %vm2019 = vcmp.ge.f32.partialorder %v1987, 0.0
      %vm2020 = vcmp.ge.f32.partialorder %v1988, 0.0
      %vm2021 = vcmp.ge.f32.partialorder %v1989, 0.0
      %vm2022 = vcmp.ge.f32.partialorder %v1990, 0.0
      %vm2023 = vcmp.ge.f32.partialorder %v1991, 0.0
      %vm2024 = vcmp.ge.f32.partialorder %v1992, 0.0
      %vm2025 = vcmp.ge.f32.partialorder %v1993, 0.0
      %vm2026 = vcmp.ge.f32.partialorder %v1994, 0.0
      %vm2027 = vcmp.ge.f32.partialorder %v1995, 0.0
      %vm2028 = vcmp.ge.f32.partialorder %v1996, 0.0
      %vm2029 = vcmp.ge.f32.partialorder %v1997, 0.0
      %vm2030 = vcmp.ge.f32.partialorder %v1998, 0.0
      %vm2031 = vcmp.ge.f32.partialorder %v1999, 0.0
      %vm2032 = vcmp.ge.f32.partialorder %v2000, 0.0
      %vm2033 = vcmp.ge.f32.partialorder %v2001, 0.0
      %vm2034 = vcmp.ge.f32.partialorder %v2002, 0.0
      %vm2035 = vcmp.ge.f32.partialorder %v2003, 0.0
      %vm2036 = vcmp.ge.f32.partialorder %v2004, 0.0
      %vm2037 = vcmp.ge.f32.partialorder %v2005, 0.0
      %vm2038 = vcmp.ge.f32.partialorder %v2006, 0.0
      %vm2039 = vcmp.ge.f32.partialorder %v2007, 0.0
      %vm2040 = vcmp.ge.f32.partialorder %v2008, 0.0
      %vm2041 = vcmp.ge.f32.partialorder %v2009, 0.0
      %vm2042 = vcmp.ge.f32.partialorder %v2010, 0.0
      %vm2043 = vcmp.ge.f32.partialorder %v2011, 0.0
      %v2044 = vld [vmem:[%s3] sm:$0x1]
      %v2046 = vlaneseq
      %v2047 = vshrl.u32 %v2046, 7
      %v2048 = vsub.s32 0, %v2047
      %v2049 = vrot.slane %v2044, %v2048
      %v2051 = vmul.f32 %v2049, %v1980
      %v2052 = vmul.f32 %v2049, %v1981
      %v2053 = vmul.f32 %v2049, %v1982
      %v2054 = vmul.f32 %v2049, %v1983
      %v2055 = vmul.f32 %v2049, %v1984
      %v2056 = vmul.f32 %v2049, %v1985
      %v2057 = vmul.f32 %v2049, %v1986
      %v2058 = vmul.f32 %v2049, %v1987
      %v2059 = vmul.f32 %v2049, %v1988
      %v2060 = vmul.f32 %v2049, %v1989
      %v2061 = vmul.f32 %v2049, %v1990
      %v2062 = vmul.f32 %v2049, %v1991
      %v2063 = vmul.f32 %v2049, %v1992
      %v2064 = vmul.f32 %v2049, %v1993
      %v2065 = vmul.f32 %v2049, %v1994
      %v2066 = vmul.f32 %v2049, %v1995
      %v2067 = vmul.f32 %v2049, %v1996
      %v2068 = vmul.f32 %v2049, %v1997
      %v2069 = vmul.f32 %v2049, %v1998
      %v2070 = vmul.f32 %v2049, %v1999
      %v2071 = vmul.f32 %v2049, %v2000
      %v2072 = vmul.f32 %v2049, %v2001
      %v2073 = vmul.f32 %v2049, %v2002
      %v2074 = vmul.f32 %v2049, %v2003
      %v2075 = vmul.f32 %v2049, %v2004
      %v2076 = vmul.f32 %v2049, %v2005
      %v2077 = vmul.f32 %v2049, %v2006
      %v2078 = vmul.f32 %v2049, %v2007
      %v2079 = vmul.f32 %v2049, %v2008
      %v2080 = vmul.f32 %v2049, %v2009
      %v2081 = vmul.f32 %v2049, %v2010
      %v2082 = vmul.f32 %v2049, %v2011
      %v2083 = vsel %vm2012, %v1980, %v2051
      %v2084 = vsel %vm2013, %v1981, %v2052
      %v2085 = vsel %vm2014, %v1982, %v2053
      %v2086 = vsel %vm2015, %v1983, %v2054
      %v2087 = vsel %vm2016, %v1984, %v2055
      %v2088 = vsel %vm2017, %v1985, %v2056
      %v2089 = vsel %vm2018, %v1986, %v2057
      %v2090 = vsel %vm2019, %v1987, %v2058
      %v2091 = vsel %vm2020, %v1988, %v2059
      %v2092 = vsel %vm2021, %v1989, %v2060
      %v2093 = vsel %vm2022, %v1990, %v2061
      %v2094 = vsel %vm2023, %v1991, %v2062
      %v2095 = vsel %vm2024, %v1992, %v2063
      %v2096 = vsel %vm2025, %v1993, %v2064
      %v2097 = vsel %vm2026, %v1994, %v2065
      %v2098 = vsel %vm2027, %v1995, %v2066
      %v2099 = vsel %vm2028, %v1996, %v2067
      %v2100 = vsel %vm2029, %v1997, %v2068
      %v2101 = vsel %vm2030, %v1998, %v2069
      %v2102 = vsel %vm2031, %v1999, %v2070
      %v2103 = vsel %vm2032, %v2000, %v2071
      %v2104 = vsel %vm2033, %v2001, %v2072
      %v2105 = vsel %vm2034, %v2002, %v2073
      %v2106 = vsel %vm2035, %v2003, %v2074
      %v2107 = vsel %vm2036, %v2004, %v2075
      %v2108 = vsel %vm2037, %v2005, %v2076
      %v2109 = vsel %vm2038, %v2006, %v2077
      %v2110 = vsel %vm2039, %v2007, %v2078
      %v2111 = vsel %vm2040, %v2008, %v2079
      %v2112 = vsel %vm2041, %v2009, %v2080
      %v2113 = vsel %vm2042, %v2010, %v2081
      %v2114 = vsel %vm2043, %v2011, %v2082
      %v2115 = vld [vmem:[%s4] sm:$0xf]
      %v2116 = vld [vmem:[%s5] sm:$0x1]
      %v2118 = vlaneseq
      %v2119 = vshrl.u32 %v2118, 7
      %v2120 = vsub.s32 0, %v2119
      %v2121 = vrot.slane %v2116, %v2120
      %vm2123 = vcmask 31744
      %v2125 = vsel %vm2123, %v2083, 0
      %v2128 = vsel %vm2123, %v2084, 0
      %v2131 = vsel %vm2123, %v2085, 0
      %v2134 = vsel %vm2123, %v2086, 0
      %v2137 = vsel %vm2123, %v2087, 0
      %v2140 = vsel %vm2123, %v2088, 0
      %v2143 = vsel %vm2123, %v2089, 0
      %v2146 = vsel %vm2123, %v2090, 0
      %v2149 = vsel %vm2123, %v2091, 0
      %v2152 = vsel %vm2123, %v2092, 0
      %v2155 = vsel %vm2123, %v2093, 0
      %v2158 = vsel %vm2123, %v2094, 0
      %v2161 = vsel %vm2123, %v2095, 0
      %v2164 = vsel %vm2123, %v2096, 0
      %v2167 = vsel %vm2123, %v2097, 0
      %v2170 = vsel %vm2123, %v2098, 0
      %v2173 = vsel %vm2123, %v2099, 0
      %v2176 = vsel %vm2123, %v2100, 0
      %v2179 = vsel %vm2123, %v2101, 0
      %v2182 = vsel %vm2123, %v2102, 0
      %v2185 = vsel %vm2123, %v2103, 0
      %v2188 = vsel %vm2123, %v2104, 0
      %v2191 = vsel %vm2123, %v2105, 0
      %v2194 = vsel %vm2123, %v2106, 0
      %v2197 = vsel %vm2123, %v2107, 0
      %v2200 = vsel %vm2123, %v2108, 0
      %v2203 = vsel %vm2123, %v2109, 0
      %v2206 = vsel %vm2123, %v2110, 0
      %v2209 = vsel %vm2123, %v2111, 0
      %v2212 = vsel %vm2123, %v2112, 0
      %v2215 = vsel %vm2123, %v2113, 0
      %v2218 = vsel %vm2123, %v2114, 0
      %vm2220 = vcmask 1043456
      %v2222 = vsel %vm2220, %v2115, 0
      %2224 = vmatprep.subr.mxu0 0.0
      %2225 = vmatpush1.msra.mxu0 0.0
      %2226 = vmatprep.subr.mxu0 0.0
      %2227 = vmatpush1.msra.mxu0 0.0
      %2228 = vmatprep.subr.mxu0 0.0
      %2229 = vmatpush1.msra.mxu0 0.0
      %2230 = vmatprep.subr.mxu0 0.0
      %2231 = vmatpush1.msra.mxu0 0.0
      %2232 = vmatprep.subr.mxu0 0.0
      %2233 = vmatpush1.msra.mxu0 0.0
      %2234 = vmatprep.subr.mxu0 0.0
      %2235 = vmatpush1.msra.mxu0 0.0
      %2236 = vmatprep.subr.mxu0 0.0
      %2237 = vmatpush1.msra.mxu0 0.0
      %2238 = vmatprep.subr.mxu0 0.0
      %2239 = vmatpush1.msra.mxu0 0.0
      %2240 = vmatprep.subr.mxu0 0.0
      %2241 = vmatpush1.msra.mxu0 0.0
      %2242 = vmatprep.subr.mxu0 0.0
      %2243 = vmatpush1.msra.mxu0 0.0
      %2244 = vmatprep.subr.mxu0 0.0
      %2245 = vmatpush1.msra.mxu0 0.0
      %2246 = vmatprep.subr.mxu0 0.0
      %2247 = vmatpush1.msra.mxu0 0.0
      %2248 = vmatprep.subr.mxu0 0.0
      %2249 = vmatpush1.msra.mxu0 0.0
      %2250 = vmatprep.subr.mxu0 0.0
      %2251 = vmatpush1.msra.mxu0 0.0
      %2252 = vmatprep.subr.mxu0 0.0
      %2253 = vmatpush1.msra.mxu0 0.0
      %2254 = vmatprep.subr.mxu0 0.0
      %2255 = vmatpush1.msra.mxu0 %v2222
      %2256 = vmatprep.subr.mxu0 0.0
      %2257 = vmatpush2.msra.mxu0 0.0
      %2258 = vmatprep.subr.mxu0 0.0
      %2259 = vmatpush2.msra.mxu0 0.0
      %2260 = vmatprep.subr.mxu0 0.0
      %2261 = vmatpush2.msra.mxu0 0.0
      %2262 = vmatprep.subr.mxu0 0.0
      %2263 = vmatpush2.msra.mxu0 0.0
      %2264 = vmatprep.subr.mxu0 0.0
      %2265 = vmatpush2.msra.mxu0 0.0
      %2266 = vmatprep.subr.mxu0 0.0
      %2267 = vmatpush2.msra.mxu0 0.0
      %2268 = vmatprep.subr.mxu0 0.0
      %2269 = vmatpush2.msra.mxu0 0.0
      %2270 = vmatprep.subr.mxu0 0.0
      %2271 = vmatpush2.msra.mxu0 0.0
      %2272 = vmatprep.subr.mxu0 0.0
      %2273 = vmatpush2.msra.mxu0 0.0
      %2274 = vmatprep.subr.mxu0 0.0
      %2275 = vmatpush2.msra.mxu0 0.0
      %2276 = vmatprep.subr.mxu0 0.0
      %2277 = vmatpush2.msra.mxu0 0.0
      %2278 = vmatprep.subr.mxu0 0.0
      %2279 = vmatpush2.msra.mxu0 0.0
      %2280 = vmatprep.subr.mxu0 0.0
      %2281 = vmatpush2.msra.mxu0 0.0
      %2282 = vmatprep.subr.mxu0 0.0
      %2283 = vmatpush2.msra.mxu0 0.0
      %2284 = vmatprep.subr.mxu0 0.0
      %2285 = vmatpush2.msra.mxu0 0.0
      %2286 = vmatprep.subr.mxu0 0.0
      %2287 = vmatpush2.msra.mxu0 0.0
      %2288 = vmatprep.mubr.f32.mxu0 0.0
      %2289 = vmatmul.mubr.f32.gmra.mxu0 %v2125
      %v2290 = vpop.f32.mrf.mxu0
      %v2291 = vadd.f32 %v2121, %v2290
      %v2292 = vpop.f32.mrf.mxu0
      %2293 = vmatprep.mubr.f32.mxu0 0.0
      %2294 = vmatmul.mubr.f32.gmra.mxu0 %v2128
      %v2295 = vpop.f32.mrf.mxu0
      %v2296 = vadd.f32 %v2121, %v2295
      %v2297 = vpop.f32.mrf.mxu0
      %2298 = vmatprep.mubr.f32.mxu0 0.0
      %2299 = vmatmul.mubr.f32.gmra.mxu0 %v2131
      %v2300 = vpop.f32.mrf.mxu0
      %v2301 = vadd.f32 %v2121, %v2300
      %v2302 = vpop.f32.mrf.mxu0
      %2303 = vmatprep.mubr.f32.mxu0 0.0
      %2304 = vmatmul.mubr.f32.gmra.mxu0 %v2134
      %v2305 = vpop.f32.mrf.mxu0
      %v2306 = vadd.f32 %v2121, %v2305
      %v2307 = vpop.f32.mrf.mxu0
      %2308 = vmatprep.mubr.f32.mxu0 0.0
      %2309 = vmatmul.mubr.f32.gmra.mxu0 %v2137
      %v2310 = vpop.f32.mrf.mxu0
      %v2311 = vadd.f32 %v2121, %v2310
      %v2312 = vpop.f32.mrf.mxu0
      %2313 = vmatprep.mubr.f32.mxu0 0.0
      %2314 = vmatmul.mubr.f32.gmra.mxu0 %v2140
      %v2315 = vpop.f32.mrf.mxu0
      %v2316 = vadd.f32 %v2121, %v2315
      %v2317 = vpop.f32.mrf.mxu0
      %2318 = vmatprep.mubr.f32.mxu0 0.0
      %2319 = vmatmul.mubr.f32.gmra.mxu0 %v2143
      %v2320 = vpop.f32.mrf.mxu0
      %v2321 = vadd.f32 %v2121, %v2320
      %v2322 = vpop.f32.mrf.mxu0
      %2323 = vmatprep.mubr.f32.mxu0 0.0
      %2324 = vmatmul.mubr.f32.gmra.mxu0 %v2146
      %v2325 = vpop.f32.mrf.mxu0
      %v2326 = vadd.f32 %v2121, %v2325
      %v2327 = vpop.f32.mrf.mxu0
      %2328 = vmatprep.mubr.f32.mxu0 0.0
      %2329 = vmatmul.mubr.f32.gmra.mxu0 %v2149
      %v2330 = vpop.f32.mrf.mxu0
      %v2331 = vadd.f32 %v2121, %v2330
      %v2332 = vpop.f32.mrf.mxu0
      %2333 = vmatprep.mubr.f32.mxu0 0.0
      %2334 = vmatmul.mubr.f32.gmra.mxu0 %v2152
      %v2335 = vpop.f32.mrf.mxu0
      %v2336 = vadd.f32 %v2121, %v2335
      %v2337 = vpop.f32.mrf.mxu0
      %2338 = vmatprep.mubr.f32.mxu0 0.0
      %2339 = vmatmul.mubr.f32.gmra.mxu0 %v2155
      %v2340 = vpop.f32.mrf.mxu0
      %v2341 = vadd.f32 %v2121, %v2340
      %v2342 = vpop.f32.mrf.mxu0
      %2343 = vmatprep.mubr.f32.mxu0 0.0
      %2344 = vmatmul.mubr.f32.gmra.mxu0 %v2158
      %v2345 = vpop.f32.mrf.mxu0
      %v2346 = vadd.f32 %v2121, %v2345
      %v2347 = vpop.f32.mrf.mxu0
      %2348 = vmatprep.mubr.f32.mxu0 0.0
      %2349 = vmatmul.mubr.f32.gmra.mxu0 %v2161
      %v2350 = vpop.f32.mrf.mxu0
      %v2351 = vadd.f32 %v2121, %v2350
      %v2352 = vpop.f32.mrf.mxu0
      %2353 = vmatprep.mubr.f32.mxu0 0.0
      %2354 = vmatmul.mubr.f32.gmra.mxu0 %v2164
      %v2355 = vpop.f32.mrf.mxu0
      %v2356 = vadd.f32 %v2121, %v2355
      %v2357 = vpop.f32.mrf.mxu0
      %2358 = vmatprep.mubr.f32.mxu0 0.0
      %2359 = vmatmul.mubr.f32.gmra.mxu0 %v2167
      %v2360 = vpop.f32.mrf.mxu0
      %v2361 = vadd.f32 %v2121, %v2360
      %v2362 = vpop.f32.mrf.mxu0
      %2363 = vmatprep.mubr.f32.mxu0 0.0
      %2364 = vmatmul.mubr.f32.gmra.mxu0 %v2170
      %v2365 = vpop.f32.mrf.mxu0
      %v2366 = vadd.f32 %v2121, %v2365
      %v2367 = vpop.f32.mrf.mxu0
      %2368 = vmatprep.mubr.f32.mxu0 0.0
      %2369 = vmatmul.mubr.f32.gmra.mxu0 %v2173
      %v2370 = vpop.f32.mrf.mxu0
      %v2371 = vadd.f32 %v2121, %v2370
      %v2372 = vpop.f32.mrf.mxu0
      %2373 = vmatprep.mubr.f32.mxu0 0.0
      %2374 = vmatmul.mubr.f32.gmra.mxu0 %v2176
      %v2375 = vpop.f32.mrf.mxu0
      %v2376 = vadd.f32 %v2121, %v2375
      %v2377 = vpop.f32.mrf.mxu0
      %2378 = vmatprep.mubr.f32.mxu0 0.0
      %2379 = vmatmul.mubr.f32.gmra.mxu0 %v2179
      %v2380 = vpop.f32.mrf.mxu0
      %v2381 = vadd.f32 %v2121, %v2380
      %v2382 = vpop.f32.mrf.mxu0
      %2383 = vmatprep.mubr.f32.mxu0 0.0
      %2384 = vmatmul.mubr.f32.gmra.mxu0 %v2182
      %v2385 = vpop.f32.mrf.mxu0
      %v2386 = vadd.f32 %v2121, %v2385
      %v2387 = vpop.f32.mrf.mxu0
      %2388 = vmatprep.mubr.f32.mxu0 0.0
      %2389 = vmatmul.mubr.f32.gmra.mxu0 %v2185
      %v2390 = vpop.f32.mrf.mxu0
      %v2391 = vadd.f32 %v2121, %v2390
      %v2392 = vpop.f32.mrf.mxu0
      %2393 = vmatprep.mubr.f32.mxu0 0.0
      %2394 = vmatmul.mubr.f32.gmra.mxu0 %v2188
      %v2395 = vpop.f32.mrf.mxu0
      %v2396 = vadd.f32 %v2121, %v2395
      %v2397 = vpop.f32.mrf.mxu0
      %2398 = vmatprep.mubr.f32.mxu0 0.0
      %2399 = vmatmul.mubr.f32.gmra.mxu0 %v2191
      %v2400 = vpop.f32.mrf.mxu0
      %v2401 = vadd.f32 %v2121, %v2400
      %v2402 = vpop.f32.mrf.mxu0
      %2403 = vmatprep.mubr.f32.mxu0 0.0
      %2404 = vmatmul.mubr.f32.gmra.mxu0 %v2194
      %v2405 = vpop.f32.mrf.mxu0
      %v2406 = vadd.f32 %v2121, %v2405
      %v2407 = vpop.f32.mrf.mxu0
      %2408 = vmatprep.mubr.f32.mxu0 0.0
      %2409 = vmatmul.mubr.f32.gmra.mxu0 %v2197
      %v2410 = vpop.f32.mrf.mxu0
      %v2411 = vadd.f32 %v2121, %v2410
      %v2412 = vpop.f32.mrf.mxu0
      %2413 = vmatprep.mubr.f32.mxu0 0.0
      %2414 = vmatmul.mubr.f32.gmra.mxu0 %v2200
      %v2415 = vpop.f32.mrf.mxu0
      %v2416 = vadd.f32 %v2121, %v2415
      %v2417 = vpop.f32.mrf.mxu0
      %2418 = vmatprep.mubr.f32.mxu0 0.0
      %2419 = vmatmul.mubr.f32.gmra.mxu0 %v2203
      %v2420 = vpop.f32.mrf.mxu0
      %v2421 = vadd.f32 %v2121, %v2420
      %v2422 = vpop.f32.mrf.mxu0
      %2423 = vmatprep.mubr.f32.mxu0 0.0
      %2424 = vmatmul.mubr.f32.gmra.mxu0 %v2206
      %v2425 = vpop.f32.mrf.mxu0
      %v2426 = vadd.f32 %v2121, %v2425
      %v2427 = vpop.f32.mrf.mxu0
      %2428 = vmatprep.mubr.f32.mxu0 0.0
      %2429 = vmatmul.mubr.f32.gmra.mxu0 %v2209
      %v2430 = vpop.f32.mrf.mxu0
      %v2431 = vadd.f32 %v2121, %v2430
      %v2432 = vpop.f32.mrf.mxu0
      %2433 = vmatprep.mubr.f32.mxu0 0.0
      %2434 = vmatmul.mubr.f32.gmra.mxu0 %v2212
      %v2435 = vpop.f32.mrf.mxu0
      %v2436 = vadd.f32 %v2121, %v2435
      %v2437 = vpop.f32.mrf.mxu0
      %2438 = vmatprep.mubr.f32.mxu0 0.0
      %2439 = vmatmul.mubr.f32.gmra.mxu0 %v2215
      %v2440 = vpop.f32.mrf.mxu0
      %v2441 = vadd.f32 %v2121, %v2440
      %v2442 = vpop.f32.mrf.mxu0
      %2443 = vmatprep.mubr.f32.mxu0 0.0
      %2444 = vmatmul.mubr.f32.gmra.mxu0 %v2218
      %v2445 = vpop.f32.mrf.mxu0
      %v2446 = vadd.f32 %v2121, %v2445
      %v2447 = vpop.f32.mrf.mxu0
      %2448 = vdwg.mxu0
      %vm2449 = vcmp.ge.f32.partialorder %v2291, 0.0
      %vm2450 = vcmp.ge.f32.partialorder %v2296, 0.0
      %vm2451 = vcmp.ge.f32.partialorder %v2301, 0.0
      %vm2452 = vcmp.ge.f32.partialorder %v2306, 0.0
      %vm2453 = vcmp.ge.f32.partialorder %v2311, 0.0
      %vm2454 = vcmp.ge.f32.partialorder %v2316, 0.0
      %vm2455 = vcmp.ge.f32.partialorder %v2321, 0.0
      %vm2456 = vcmp.ge.f32.partialorder %v2326, 0.0
      %vm2457 = vcmp.ge.f32.partialorder %v2331, 0.0
      %vm2458 = vcmp.ge.f32.partialorder %v2336, 0.0
      %vm2459 = vcmp.ge.f32.partialorder %v2341, 0.0
      %vm2460 = vcmp.ge.f32.partialorder %v2346, 0.0
      %vm2461 = vcmp.ge.f32.partialorder %v2351, 0.0
      %vm2462 = vcmp.ge.f32.partialorder %v2356, 0.0
      %vm2463 = vcmp.ge.f32.partialorder %v2361, 0.0
      %vm2464 = vcmp.ge.f32.partialorder %v2366, 0.0
      %vm2465 = vcmp.ge.f32.partialorder %v2371, 0.0
      %vm2466 = vcmp.ge.f32.partialorder %v2376, 0.0
      %vm2467 = vcmp.ge.f32.partialorder %v2381, 0.0
      %vm2468 = vcmp.ge.f32.partialorder %v2386, 0.0
      %vm2469 = vcmp.ge.f32.partialorder %v2391, 0.0
      %vm2470 = vcmp.ge.f32.partialorder %v2396, 0.0
      %vm2471 = vcmp.ge.f32.partialorder %v2401, 0.0
      %vm2472 = vcmp.ge.f32.partialorder %v2406, 0.0
      %vm2473 = vcmp.ge.f32.partialorder %v2411, 0.0
      %vm2474 = vcmp.ge.f32.partialorder %v2416, 0.0
      %vm2475 = vcmp.ge.f32.partialorder %v2421, 0.0
      %vm2476 = vcmp.ge.f32.partialorder %v2426, 0.0
      %vm2477 = vcmp.ge.f32.partialorder %v2431, 0.0
      %vm2478 = vcmp.ge.f32.partialorder %v2436, 0.0
      %vm2479 = vcmp.ge.f32.partialorder %v2441, 0.0
      %vm2480 = vcmp.ge.f32.partialorder %v2446, 0.0
      %v2481 = vld [vmem:[%s6] sm:$0x1]
      %v2483 = vlaneseq
      %v2484 = vshrl.u32 %v2483, 7
      %v2485 = vsub.s32 0, %v2484
      %v2486 = vrot.slane %v2481, %v2485
      %v2488 = vmul.f32 %v2486, %v2291
      %v2489 = vmul.f32 %v2486, %v2296
      %v2490 = vmul.f32 %v2486, %v2301
      %v2491 = vmul.f32 %v2486, %v2306
      %v2492 = vmul.f32 %v2486, %v2311
      %v2493 = vmul.f32 %v2486, %v2316
      %v2494 = vmul.f32 %v2486, %v2321
      %v2495 = vmul.f32 %v2486, %v2326
      %v2496 = vmul.f32 %v2486, %v2331
      %v2497 = vmul.f32 %v2486, %v2336
      %v2498 = vmul.f32 %v2486, %v2341
      %v2499 = vmul.f32 %v2486, %v2346
      %v2500 = vmul.f32 %v2486, %v2351
      %v2501 = vmul.f32 %v2486, %v2356
      %v2502 = vmul.f32 %v2486, %v2361
      %v2503 = vmul.f32 %v2486, %v2366
      %v2504 = vmul.f32 %v2486, %v2371
      %v2505 = vmul.f32 %v2486, %v2376
      %v2506 = vmul.f32 %v2486, %v2381
      %v2507 = vmul.f32 %v2486, %v2386
      %v2508 = vmul.f32 %v2486, %v2391
      %v2509 = vmul.f32 %v2486, %v2396
      %v2510 = vmul.f32 %v2486, %v2401
      %v2511 = vmul.f32 %v2486, %v2406
      %v2512 = vmul.f32 %v2486, %v2411
      %v2513 = vmul.f32 %v2486, %v2416
      %v2514 = vmul.f32 %v2486, %v2421
      %v2515 = vmul.f32 %v2486, %v2426
      %v2516 = vmul.f32 %v2486, %v2431
      %v2517 = vmul.f32 %v2486, %v2436
      %v2518 = vmul.f32 %v2486, %v2441
      %v2519 = vmul.f32 %v2486, %v2446
      %v2520 = vsel %vm2449, %v2291, %v2488
      %v2521 = vsel %vm2450, %v2296, %v2489
      %v2522 = vsel %vm2451, %v2301, %v2490
      %v2523 = vsel %vm2452, %v2306, %v2491
      %v2524 = vsel %vm2453, %v2311, %v2492
      %v2525 = vsel %vm2454, %v2316, %v2493
      %v2526 = vsel %vm2455, %v2321, %v2494
      %v2527 = vsel %vm2456, %v2326, %v2495
      %v2528 = vsel %vm2457, %v2331, %v2496
      %v2529 = vsel %vm2458, %v2336, %v2497
      %v2530 = vsel %vm2459, %v2341, %v2498
      %v2531 = vsel %vm2460, %v2346, %v2499
      %v2532 = vsel %vm2461, %v2351, %v2500
      %v2533 = vsel %vm2462, %v2356, %v2501
      %v2534 = vsel %vm2463, %v2361, %v2502
      %v2535 = vsel %vm2464, %v2366, %v2503
      %v2536 = vsel %vm2465, %v2371, %v2504
      %v2537 = vsel %vm2466, %v2376, %v2505
      %v2538 = vsel %vm2467, %v2381, %v2506
      %v2539 = vsel %vm2468, %v2386, %v2507
      %v2540 = vsel %vm2469, %v2391, %v2508
      %v2541 = vsel %vm2470, %v2396, %v2509
      %v2542 = vsel %vm2471, %v2401, %v2510
      %v2543 = vsel %vm2472, %v2406, %v2511
      %v2544 = vsel %vm2473, %v2411, %v2512
      %v2545 = vsel %vm2474, %v2416, %v2513
      %v2546 = vsel %vm2475, %v2421, %v2514
      %v2547 = vsel %vm2476, %v2426, %v2515
      %v2548 = vsel %vm2477, %v2431, %v2516
      %v2549 = vsel %vm2478, %v2436, %v2517
      %v2550 = vsel %vm2479, %v2441, %v2518
      %v2551 = vsel %vm2480, %v2446, %v2519
      %vm2552 = vcmask 64512
      %2553 = vst.msk [vmem:[%s278] sm:$0xff] %vm2552, %v2520
      %2554 = vst.msk [vmem:[%s278 + $0x8] sm:$0xff] %vm2552, %v2521
      %2555 = vst.msk [vmem:[%s278 + $0x10] sm:$0xff] %vm2552, %v2522
      %2556 = vst.msk [vmem:[%s278 + $0x18] sm:$0xff] %vm2552, %v2523
      %2557 = vst.msk [vmem:[%s278 + $0x20] sm:$0xff] %vm2552, %v2524
      %2558 = vst.msk [vmem:[%s278 + $0x28] sm:$0xff] %vm2552, %v2525
      %2559 = vst.msk [vmem:[%s278 + $0x30] sm:$0xff] %vm2552, %v2526
      %2560 = vst.msk [vmem:[%s278 + $0x38] sm:$0xff] %vm2552, %v2527
      %2561 = vst.msk [vmem:[%s278 + $0x40] sm:$0xff] %vm2552, %v2528
      %2562 = vst.msk [vmem:[%s278 + $0x48] sm:$0xff] %vm2552, %v2529
      %2563 = vst.msk [vmem:[%s278 + $0x50] sm:$0xff] %vm2552, %v2530
      %2564 = vst.msk [vmem:[%s278 + $0x58] sm:$0xff] %vm2552, %v2531
      %2565 = vst.msk [vmem:[%s278 + $0x60] sm:$0xff] %vm2552, %v2532
      %2566 = vst.msk [vmem:[%s278 + $0x68] sm:$0xff] %vm2552, %v2533
      %2567 = vst.msk [vmem:[%s278 + $0x70] sm:$0xff] %vm2552, %v2534
      %2568 = vst.msk [vmem:[%s278 + $0x78] sm:$0xff] %vm2552, %v2535
      %2569 = vst.msk [vmem:[%s278 + $0x80] sm:$0xff] %vm2552, %v2536
      %2570 = vst.msk [vmem:[%s278 + $0x88] sm:$0xff] %vm2552, %v2537
      %2571 = vst.msk [vmem:[%s278 + $0x90] sm:$0xff] %vm2552, %v2538
      %2572 = vst.msk [vmem:[%s278 + $0x98] sm:$0xff] %vm2552, %v2539
      %2573 = vst.msk [vmem:[%s278 + $0xa0] sm:$0xff] %vm2552, %v2540
      %2574 = vst.msk [vmem:[%s278 + $0xa8] sm:$0xff] %vm2552, %v2541
      %2575 = vst.msk [vmem:[%s278 + $0xb0] sm:$0xff] %vm2552, %v2542
      %2576 = vst.msk [vmem:[%s278 + $0xb8] sm:$0xff] %vm2552, %v2543
      %2577 = vst.msk [vmem:[%s278 + $0xc0] sm:$0xff] %vm2552, %v2544
      %2578 = vst.msk [vmem:[%s278 + $0xc8] sm:$0xff] %vm2552, %v2545
      %2579 = vst.msk [vmem:[%s278 + $0xd0] sm:$0xff] %vm2552, %v2546
      %2580 = vst.msk [vmem:[%s278 + $0xd8] sm:$0xff] %vm2552, %v2547
      %2581 = vst.msk [vmem:[%s278 + $0xe0] sm:$0xff] %vm2552, %v2548
      %2582 = vst.msk [vmem:[%s278 + $0xe8] sm:$0xff] %vm2552, %v2549
      %2583 = vst.msk [vmem:[%s278 + $0xf0] sm:$0xff] %vm2552, %v2550
      %2584 = vst.msk [vmem:[%s278 + $0xf8] sm:$0xff] %vm2552, %v2551
      %p2585 = scmp.lt.s32.totalorder %s18, 1
      %s2586 = scalar_select %p2585, %s18, 1
      %s2587 = smul.addr %s2586, 32
      %s2588 = smul.addr %s2587, 8
      %s2589 = scalar_lea.vmem %s7, %s2588
      // Predicated region
      $region49: #{tpu_custom_call.1} parent=47 // pred_check
        %p2590 = pneg %p188
      $region50: #{tpu_custom_call.1} parent=47 // pred_check_branch
        %2592 = sbr.rel (%p2590) target = $region52
      $region51: #{tpu_custom_call.1} parent=47 // pred_region
        _
      $region52: #{tpu_custom_call.1} parent=47 // pred_fallthru
        _
    $region48: #{tpu_custom_call.1} parent=5 // pred_fallthru
      _
    %p2593 = scmp.le.s32.totalorder 2, %s13
    // Predicated region
    $region53: #{tpu_custom_call.1} parent=5 // pred_check
      %p2594 = pneg %p2593
    $region54: #{tpu_custom_call.1} parent=5 // pred_check_branch
      %2596 = sbr.rel (%p2594) target = $region56
    $region55: #{tpu_custom_call.1} parent=5 // pred_region
      %s2597 = ssub.s32 %s13, 2
      // Predicated region
      $region57: #{tpu_custom_call.1} parent=55 // pred_check
        %p2598 = pneg %p194
      $region58: #{tpu_custom_call.1} parent=55 // pred_check_branch
        %2600 = sbr.rel (%p2598) target = $region60
      $region59: #{tpu_custom_call.1} parent=55 // pred_region
        %p2601 = scmp.lt.s32.totalorder %s19, 1
        %s2602 = scalar_select %p2601, %s19, 1
        %s2603 = smul.addr %s2602, 32
        %s2604 = smul.addr %s2603, 8
        %s2605 = scalar_lea.vmem %s7, %s2604
      $region60: #{tpu_custom_call.1} parent=55 // pred_fallthru
        _
    $region56: #{tpu_custom_call.1} parent=5 // pred_fallthru
      _
  $region6: #{tpu_custom_call.1} parent=0 // loop_footer
    %s17 = sadd.s32 1, %s13
  $region7: #{tpu_custom_call.1} parent=0 // loop_footer_branch
    %12 = sbr.rel target = $region3
  $region8: #{tpu_custom_call.1} parent=0 // loop_exit
    _

</llo_original>
